<compile_context>
chip_gen: v5e
topology: v5e:2x2
jax: 0.10.0
libtpu: 0.0.40
codegen_flags: <defaults>
</compile_context>

<pallas_src>
import math
from functools import partial

import jax
import jax.numpy as jnp
import numpy as np
from jax import lax
from jax.experimental import pallas as pl
from jax.experimental.pallas import tpu as pltpu


def _round_up(x, m):
    return ((x + m - 1) // m) * m


# ---------------------------------------------------------------------------
# Fused kernel.
#
# Refs (inputs, full blocks, grid=(1,)):
#   x_ref     (S*BP, KP)  bf16  stacked rows per (time, padded batch):
#                               [x(b,t) | x(b,S-1-t) | 1 | 1 | 0-pad]
#   w_ih_ref  (KP, 6H)    bf16  block input weights + folded biases,
#                               gate cols interleaved [r_f|r_b|z_f|z_b|n_f|n_b]
#   w_hh_ref  (2H, 6H)    bf16  block-diagonal hidden weights (fwd rows | bwd rows)
#   b_hn_ref  (1, 2H)     f32   hidden bias of the n gate [n_f | n_b]
#   w_lin_ref (2, H, H)   bf16  Linear weight split [fwd half, bwd half], (in,out)
#   b_lin_ref (1, H)      f32
# Output:
#   o_ref     (S*BP, H)   f32   rows (t*BP + b); b < B are real, rest padding
# Scratch:
#   gi_scr    (S*BP, 6H)  f32   hoisted input projections (both dirs, all gates)
#   of_scr    (S*BP, H)   f32   fwd hidden, indexed by real time
#   ob_scr    (S*BP, H)   f32   bwd hidden, indexed by real time
# ---------------------------------------------------------------------------
def birnn_linear_kernel(x_ref, w_ih_ref, w_hh_ref, b_hn_ref, w_lin_ref,
                        b_lin_ref, o_ref, gi_scr, of_scr, ob_scr,
                        *, seq_len, b_pad, hidden):
    S, BP, H = seq_len, b_pad, hidden
    H2, H4 = 2 * H, 4 * H

    # -- 1) hoisted input projection: one MXU matmul for all timesteps, both
    #       directions and all gates; b_ih and the r/z half of b_hh are folded
    #       in via the ones-column of x.  Stored flat once (no re-layout).
    gi_scr[...] = jnp.dot(x_ref[...], w_ih_ref[...],
                          preferred_element_type=jnp.float32)

    # hoist weight / bias loads out of the recurrence (no per-iter reloads)
    w_hh = w_hh_ref[...]            # (2H, 6H) bf16
    b_hn = b_hn_ref[...]            # (1, 2H)  f32

    # -- 2) fused bidirectional recurrence.
    #       h carries [h_fwd | h_bwd] along lanes; rows = padded batch.
    def step(t, h):
        row_f = pl.multiple_of(t * BP, BP)            # aligned 8-row slices
        row_b = pl.multiple_of((S - 1 - t) * BP, BP)
        git = gi_scr[pl.ds(row_f, BP), :]                             # (BP, 6H)
        gh = jnp.dot(h.astype(jnp.bfloat16), w_hh,
                     preferred_element_type=jnp.float32)              # (BP, 6H)
        # one sigmoid for r+z of BOTH directions (full (8,128) vreg), one tanh
        rz = jax.nn.sigmoid(git[:, :H4] + gh[:, :H4])                 # (BP, 4H)
        r = rz[:, :H2]
        z = rz[:, H2:]
        n = jnp.tanh(git[:, H4:] + r * (gh[:, H4:] + b_hn))           # (BP, 2H)
        h_new = (1.0 - z) * n + z * h
        # two aligned full-sublane stores per step (fwd at t, bwd at S-1-t);
        # indexing bwd by its real time removes any epilogue reversal.
        of_scr[pl.ds(row_f, BP), :] = h_new[:, :H]
        ob_scr[pl.ds(row_b, BP), :] = h_new[:, H:]
        return h_new

    h0 = jnp.zeros((BP, H2), jnp.float32)
    lax.fori_loop(0, S, step, h0, unroll=min(S, 8))   # bounded unroll

    # -- 3) fused Linear(2H -> H) epilogue: one full-slab matmul per direction
    #       (no (S,B,2H) concat), one contiguous output store.
    y = (jnp.dot(of_scr[...].astype(jnp.bfloat16), w_lin_ref[0],
                 preferred_element_type=jnp.float32)
         + jnp.dot(ob_scr[...].astype(jnp.bfloat16), w_lin_ref[1],
                   preferred_element_type=jnp.float32)
         + b_lin_ref[...])
    o_ref[...] = y


# ---------------------------------------------------------------------------
# Wrapper-side input plumbing (tiny XLA ops): time-major, fwd|bwd|ones|pad
# columns, batch padded to 8 rows per step so every in-kernel slice is a full,
# aligned sublane tile.
# TODO(synk): when S is tiled on the grid, move this re-layout into the
# kernel's BlockSpec index_map instead of materializing x_stk.
# ---------------------------------------------------------------------------
def _build_x_stacked(x, b_pad, k_pad):
    B, S, I = x.shape
    x_f = jnp.transpose(x, (1, 0, 2))              # (S, B, I)  time-major
    x_b = x_f[::-1]                                # (S, B, I)  reversed time
    ones = jnp.ones((S, B, 2), x.dtype)            # bias selector columns
    zc = jnp.zeros((S, B, k_pad - 2 * I - 2), x.dtype)
    rows = jnp.concatenate([x_f, x_b, ones, zc], axis=-1)          # (S, B, KP)
    rows = jnp.concatenate(
        [rows, jnp.zeros((S, b_pad - B, k_pad), x.dtype)], axis=1)  # (S, BP, KP)
    return rows.reshape(S * b_pad, k_pad).astype(jnp.bfloat16)


def birnn_linear_fused(x, packed):
    """x: (B, S, I) float32.  Returns (B, S, H)."""
    B, S, I = x.shape
    KP, H6 = packed["w_ih_blk"].shape
    H = H6 // 6
    BP = max(8, _round_up(B, 8))
    x_stk = _build_x_stacked(x, BP, KP)

    kernel = partial(birnn_linear_kernel, seq_len=S, b_pad=BP, hidden=H)
    out = pl.pallas_call(
        kernel,
        out_shape=jax.ShapeDtypeStruct((S * BP, H), jnp.float32),
        grid=(1,),
        in_specs=[
            pl.BlockSpec((S * BP, KP), lambda i: (0, 0)),
            pl.BlockSpec((KP, 6 * H), lambda i: (0, 0)),
            pl.BlockSpec((2 * H, 6 * H), lambda i: (0, 0)),
            pl.BlockSpec((1, 2 * H), lambda i: (0, 0)),
            pl.BlockSpec((2, H, H), lambda i: (0, 0, 0)),
            pl.BlockSpec((1, H), lambda i: (0, 0)),
        ],
        out_specs=pl.BlockSpec((S * BP, H), lambda i: (0, 0)),
        scratch_shapes=[
            pltpu.VMEM((S * BP, 6 * H), jnp.float32),   # hoisted gate projections
            pltpu.VMEM((S * BP, H), jnp.float32),       # fwd hidden (real time)
            pltpu.VMEM((S * BP, H), jnp.float32),       # bwd hidden (real time)
        ],
        compiler_params=pltpu.CompilerParams(
            dimension_semantics=("arbitrary",),
            vmem_limit_bytes=32 * 1024 * 1024),
    )(x_stk, packed["w_ih_blk"], packed["w_hh_blk"], packed["b_hn"],
      packed["w_lin_stk"], packed["b_lin"])

    # single contiguous kernel-side slab -> (B, S, H); tiny wrapper transpose.
    return jnp.transpose(out.reshape(S, BP, H)[:, :B, :], (1, 0, 2))


# ---------------------------------------------------------------------------
# One-time weight packing (torch layout -> kernel block layout).
# Gate-column layout (6H): [ r_f | r_b | z_f | z_b | n_f | n_b ].
# ---------------------------------------------------------------------------
def pack_params(params):
    H = params["b_lin"].shape[0]
    I = params["w_ih_f"].shape[1]
    KP = _round_up(2 * I + 2, 8)

    def gate(w, g):          # torch (3H, X) -> (X, H), right-multiply layout
        return w[g * H:(g + 1) * H, :].T

    zI = jnp.zeros((I, H), jnp.float32)
    zH = jnp.zeros((H, H), jnp.float32)
    z1 = jnp.zeros((H,), jnp.float32)

    # ---- W_ih block: rows = [x_fwd (I) | x_bwd (I) | 1_fwd | 1_bwd | 0-pad]
    cols = []
    for g in range(3):
        wf, wb = gate(params["w_ih_f"], g), gate(params["w_ih_b"], g)
        if g < 2:   # r, z: fold b_ih + b_hh fully into the hoisted projection
            bf = params["b_ih_f"][g * H:(g + 1) * H] + params["b_hh_f"][g * H:(g + 1) * H]
            bb = params["b_ih_b"][g * H:(g + 1) * H] + params["b_hh_b"][g * H:(g + 1) * H]
        else:       # n: only b_ih folds (b_hh_n stays inside r*(.))
            bf = params["b_ih_f"][2 * H:]
            bb = params["b_ih_b"][2 * H:]
        blk = jnp.concatenate([
            jnp.concatenate([wf, zI], axis=1),        # x_fwd rows
            jnp.concatenate([zI, wb], axis=1),        # x_bwd rows
            jnp.concatenate([bf, z1])[None, :],       # fwd bias selector row
            jnp.concatenate([z1, bb])[None, :],       # bwd bias selector row
        ], axis=0)                                    # (2I+2, 2H)
        cols.append(blk)
    w_ih_blk = jnp.concatenate(cols, axis=1)          # (2I+2, 6H)
    w_ih_blk = jnp.concatenate(
        [w_ih_blk, jnp.zeros((KP - 2 * I - 2, 6 * H), jnp.float32)], axis=0)

    # ---- W_hh block-diagonal: rows = [h_fwd (H) | h_bwd (H)]
    cols = []
    for g in range(3):
        wf, wb = gate(params["w_hh_f"], g), gate(params["w_hh_b"], g)
        blk = jnp.concatenate([
            jnp.concatenate([wf, zH], axis=1),
            jnp.concatenate([zH, wb], axis=1),
        ], axis=0)                                    # (2H, 2H)
        cols.append(blk)
    w_hh_blk = jnp.concatenate(cols, axis=1)          # (2H, 6H)

    b_hn = jnp.concatenate([params["b_hh_f"][2 * H:],
                            params["b_hh_b"][2 * H:]])[None, :]        # (1, 2H)

    w_lin_stk = jnp.stack([params["w_lin"][:, :H].T,
                           params["w_lin"][:, H:].T])                  # (2, H, H)

    return {
        "w_ih_blk": w_ih_blk.astype(jnp.bfloat16),    # bf16 MXU operands
        "w_hh_blk": w_hh_blk.astype(jnp.bfloat16),
        "b_hn": b_hn,                                 # f32 (VPU path)
        "w_lin_stk": w_lin_stk.astype(jnp.bfloat16),
        "b_lin": params["b_lin"][None, :],            # f32
    }


@jax.jit
def rnn_graph_wrapper_forward(x, adj, copy_length, packed):
    """x: (B, S, I) float32.  adj / copy_length unused (as in the torch forward)."""
    del adj, copy_length
    return birnn_linear_fused(x, packed)


# ---------------------------------------------------------------------------
# Check (a): JAX emulation of the packed/block math at matched (bf16 operand,
# f32 accumulate) precision — tight structural check of the Pallas lowering.
# ---------------------------------------------------------------------------
def emulate_packed(x_stk, packed, S, BP, H):
    gi = jnp.dot(x_stk, packed["w_ih_blk"], preferred_element_type=jnp.float32)
    w_hh, b_hn = packed["w_hh_blk"], packed["b_hn"]
    h = jnp.zeros((BP, 2 * H), jnp.float32)
    of = [None] * S
    ob = [None] * S
    for t in range(S):
        git = gi[t * BP:(t + 1) * BP]
        gh = jnp.dot(h.astype(jnp.bfloat16), w_hh, preferred_element_type=jnp.float32)
        rz = jax.nn.sigmoid(git[:, :4 * H] + gh[:, :4 * H])
        r, z = rz[:, :2 * H], rz[:, 2 * H:]
        n = jnp.tanh(git[:, 4 * H:] + r * (gh[:, 4 * H:] + b_hn))
        h = (1.0 - z) * n + z * h
        of[t] = h[:, :H]
        ob[S - 1 - t] = h[:, H:]
    Of, Ob = jnp.concatenate(of, axis=0), jnp.concatenate(ob, axis=0)
    y = (jnp.dot(Of.astype(jnp.bfloat16), packed["w_lin_stk"][0],
                 preferred_element_type=jnp.float32)
         + jnp.dot(Ob.astype(jnp.bfloat16), packed["w_lin_stk"][1],
                   preferred_element_type=jnp.float32)
         + packed["b_lin"])
    return y  # (S*BP, H)


# ---------------------------------------------------------------------------
# Check (b): pure-f32 reference mirroring torch.nn.GRU(bidirectional)+Linear.
# ---------------------------------------------------------------------------
def gru_ref(x_tm, w_ih, w_hh, b_ih, b_hh):
    S, B, _ = x_tm.shape
    H = w_hh.shape[1]
    h = jnp.zeros((B, H), jnp.float32)
    outs = []
    for t in range(S):
        gi = x_tm[t] @ w_ih.T + b_ih
        gh = h @ w_hh.T + b_hh
        r = jax.nn.sigmoid(gi[:, :H] + gh[:, :H])
        z = jax.nn.sigmoid(gi[:, H:2 * H] + gh[:, H:2 * H])
        n = jnp.tanh(gi[:, 2 * H:] + r * gh[:, 2 * H:])
        h = (1.0 - z) * n + z * h
        outs.append(h)
    return jnp.stack(outs)


def reference_forward(x, params):
    x_tm = jnp.transpose(x, (1, 0, 2))
    o_f = gru_ref(x_tm, params["w_ih_f"], params["w_hh_f"],
                  params["b_ih_f"], params["b_hh_f"])
    o_b = gru_ref(x_tm[::-1], params["w_ih_b"], params["w_hh_b"],
                  params["b_ih_b"], params["b_hh_b"])[::-1]
    o = jnp.concatenate([o_f, o_b], axis=-1)
    y = o @ params["w_lin"].T + params["b_lin"]
    return jnp.transpose(y, (1, 0, 2))


# ---------------------------------------------------------------------------
if __name__ == "__main__":
    B, S, H = 2, 8, 32
    I = H  # input_size == hidden_size

    key = jax.random.PRNGKey(0)
    ks = jax.random.split(key, 12)
    bound = 1.0 / math.sqrt(H)

    def u(k, shape):
        return jax.random.uniform(k, shape, jnp.float32, -bound, bound)

    params = {
        "w_ih_f": u(ks[0], (3 * H, I)), "w_hh_f": u(ks[1], (3 * H, H)),
        "b_ih_f": u(ks[2], (3 * H,)),   "b_hh_f": u(ks[3], (3 * H,)),
        "w_ih_b": u(ks[4], (3 * H, I)), "w_hh_b": u(ks[5], (3 * H, H)),
        "b_ih_b": u(ks[6], (3 * H,)),   "b_hh_b": u(ks[7], (3 * H,)),
        "w_lin": u(ks[8], (H, 2 * H)),  "b_lin": u(ks[9], (H,)),
    }
    packed = pack_params(params)

    x = jax.random.normal(ks[10], (B, S, I), jnp.float32)
    adj = jnp.zeros((B, S, S), jnp.float32)        # unused by forward
    copy_length = jnp.full((B,), S, jnp.int32)     # unused by forward

    out = rnn_graph_wrapper_forward(x, adj, copy_length, packed)
    out = jax.block_until_ready(out)
    assert out.shape == (B, S, H)

    # (a) tight check vs JAX emulation at matched (bf16 MXU operand) precision
    BP = max(8, _round_up(B, 8))
    KP = packed["w_ih_blk"].shape[0]
    x_stk = _build_x_stacked(x, BP, KP)
    emu = emulate_packed(x_stk, packed, S, BP, H)
    emu_bsh = jnp.transpose(emu.reshape(S, BP, H)[:, :B, :], (1, 0, 2))
    np.testing.assert_allclose(np.asarray(out), np.asarray(emu_bsh),
                               rtol=2e-3, atol=2e-3)

    # (b) loose check vs the full-f32 torch-mirroring reference; tolerance is
    #     sized for bf16 MXU operands (f32 accumulation) over an 8-step GRU.
    ref = reference_forward(x, params)
    np.testing.assert_allclose(np.asarray(out), np.asarray(ref),
                               rtol=5e-2, atol=5e-2)

    print("KERNEL_OK")
</pallas_src>

<mosaic_0001>
module attributes {stable_mosaic.version = 11 : i64} {
  func.func @birnn_linear_kernel(%arg0: i32, %arg1: memref<64x72xbf16, #tpu.memory_space<vmem>>, %arg2: memref<72x192xbf16, #tpu.memory_space<vmem>>, %arg3: memref<64x192xbf16, #tpu.memory_space<vmem>>, %arg4: memref<1x64xf32, #tpu.memory_space<vmem>>, %arg5: memref<2x32x32xbf16, #tpu.memory_space<vmem>>, %arg6: memref<1x32xf32, #tpu.memory_space<vmem>>, %arg7: memref<64x32xf32, #tpu.memory_space<vmem>>, %arg8: memref<64x192xf32, #tpu.memory_space<vmem>>, %arg9: memref<64x32xf32, #tpu.memory_space<vmem>>, %arg10: memref<64x32xf32, #tpu.memory_space<vmem>>) attributes {dimension_semantics = [#tpu.dimension_semantics<arbitrary>], iteration_bounds = array<i64: 1>, scalar_prefetch = 0 : i64, scratch_operands = 3 : i64, tpu.core_type = #tpu.core_type<tc>, window_params = [{pipeline_mode = #tpu.pipeline_mode<synchronous>, transform_indices = @transform_0, window_bounds = array<i64: 64, 72>}, {pipeline_mode = #tpu.pipeline_mode<synchronous>, transform_indices = @transform_1, window_bounds = array<i64: 72, 192>}, {pipeline_mode = #tpu.pipeline_mode<synchronous>, transform_indices = @transform_2, window_bounds = array<i64: 64, 192>}, {pipeline_mode = #tpu.pipeline_mode<synchronous>, transform_indices = @transform_3, window_bounds = array<i64: 1, 64>}, {pipeline_mode = #tpu.pipeline_mode<synchronous>, transform_indices = @transform_4, window_bounds = array<i64: 2, 32, 32>}, {pipeline_mode = #tpu.pipeline_mode<synchronous>, transform_indices = @transform_5, window_bounds = array<i64: 1, 32>}, {pipeline_mode = #tpu.pipeline_mode<synchronous>, transform_indices = @transform_6, window_bounds = array<i64: 64, 32>}]} {
    %c0 = arith.constant 0 : index
    %c0_0 = arith.constant 0 : index
    %0 = vector.load %arg1[%c0, %c0_0] : memref<64x72xbf16, #tpu.memory_space<vmem>>, vector<64x72xbf16>
    %c0_1 = arith.constant 0 : index
    %c0_2 = arith.constant 0 : index
    %1 = vector.load %arg2[%c0_1, %c0_2] : memref<72x192xbf16, #tpu.memory_space<vmem>>, vector<72x192xbf16>
    %cst = arith.constant dense<0.000000e+00> : vector<64x192xf32>
    %2 = tpu.matmul %0, %1, %cst {dimension_numbers = #tpu.dot_dimension_numbers<[1], [0], [0], [1], [0, 0, 1, 1], [], []>} : vector<64x72xbf16>, vector<72x192xbf16>, vector<64x192xf32> -> vector<64x192xf32>
    %c0_3 = arith.constant 0 : index
    %c0_4 = arith.constant 0 : index
    %3 = vector.load %arg8[%c0_3, %c0_4] : memref<64x192xf32, #tpu.memory_space<vmem>>, vector<64x192xf32>
    tpu.vector_store %arg8[%c0_3, %c0_4], %2 {strides = array<i32>} : memref<64x192xf32, #tpu.memory_space<vmem>>, vector<64x192xf32>,
    %c0_5 = arith.constant 0 : index
    %c0_6 = arith.constant 0 : index
    %4 = vector.load %arg3[%c0_5, %c0_6] : memref<64x192xbf16, #tpu.memory_space<vmem>>, vector<64x192xbf16>
    %c0_7 = arith.constant 0 : index
    %c0_8 = arith.constant 0 : index
    %5 = vector.load %arg4[%c0_7, %c0_8] : memref<1x64xf32, #tpu.memory_space<vmem>>, vector<1x64xf32>
    %cst_9 = arith.constant 0.000000e+00 : f32
    %6 = vector.broadcast %cst_9 : f32 to vector<8x64xf32>
    %c0_i32 = arith.constant 0 : i32
    %c8_i32 = arith.constant 8 : i32
    %7 = arith.muli %c0_i32, %c8_i32 : i32
    %8 = tpu.assume_multiple %7, 8 : i32
    %c7_i32 = arith.constant 7 : i32
    %9 = arith.subi %c7_i32, %c0_i32 : i32
    %c8_i32_10 = arith.constant 8 : i32
    %10 = arith.muli %9, %c8_i32_10 : i32
    %11 = tpu.assume_multiple %10, 8 : i32
    %12 = arith.index_cast %8 : i32 to index
    %c0_11 = arith.constant 0 : index
    %13 = vector.load %arg8[%12, %c0_11] : memref<64x192xf32, #tpu.memory_space<vmem>>, vector<8x192xf32>
    %14 = arith.truncf %6 : vector<8x64xf32> to vector<8x64xbf16>
    %cst_12 = arith.constant dense<0.000000e+00> : vector<8x192xf32>
    %15 = tpu.matmul %14, %4, %cst_12 {dimension_numbers = #tpu.dot_dimension_numbers<[1], [0], [0], [1], [0, 0, 1, 1], [], []>} : vector<8x64xbf16>, vector<64x192xbf16>, vector<8x192xf32> -> vector<8x192xf32>
    %16 = vector.extract_strided_slice %13 {offsets = [0, 0], sizes = [8, 128], strides = [1, 1]} : vector<8x192xf32> to vector<8x128xf32>
    %17 = vector.extract_strided_slice %15 {offsets = [0, 0], sizes = [8, 128], strides = [1, 1]} : vector<8x192xf32> to vector<8x128xf32>
    %18 = arith.addf %16, %17 : vector<8x128xf32>
    %19 = arith.negf %18 : vector<8x128xf32>
    %20 = math.exp %19 : vector<8x128xf32>
    %cst_13 = arith.constant 1.000000e+00 : f32
    %21 = vector.broadcast %cst_13 : f32 to vector<8x128xf32>
    %22 = arith.addf %21, %20 : vector<8x128xf32>
    %23 = arith.divf %21, %22 : vector<8x128xf32>
    %24 = vector.extract_strided_slice %23 {offsets = [0, 0], sizes = [8, 64], strides = [1, 1]} : vector<8x128xf32> to vector<8x64xf32>
    %25 = vector.extract_strided_slice %23 {offsets = [0, 64], sizes = [8, 64], strides = [1, 1]} : vector<8x128xf32> to vector<8x64xf32>
    %26 = vector.extract_strided_slice %13 {offsets = [0, 128], sizes = [8, 64], strides = [1, 1]} : vector<8x192xf32> to vector<8x64xf32>
    %27 = vector.extract_strided_slice %15 {offsets = [0, 128], sizes = [8, 64], strides = [1, 1]} : vector<8x192xf32> to vector<8x64xf32>
    %28 = vector.broadcast %5 : vector<1x64xf32> to vector<8x64xf32>
    %29 = arith.addf %27, %28 : vector<8x64xf32>
    %30 = arith.mulf %24, %29 : vector<8x64xf32>
    %31 = arith.addf %26, %30 : vector<8x64xf32>
    %32 = math.tanh %31 : vector<8x64xf32>
    %cst_14 = arith.constant 1.000000e+00 : f32
    %33 = vector.broadcast %cst_14 : f32 to vector<8x64xf32>
    %34 = arith.subf %33, %25 : vector<8x64xf32>
    %35 = arith.mulf %34, %32 : vector<8x64xf32>
    %36 = arith.mulf %25, %6 : vector<8x64xf32>
    %37 = arith.addf %35, %36 : vector<8x64xf32>
    %38 = vector.extract_strided_slice %37 {offsets = [0, 0], sizes = [8, 32], strides = [1, 1]} : vector<8x64xf32> to vector<8x32xf32>
    %39 = arith.index_cast %8 : i32 to index
    %c0_15 = arith.constant 0 : index
    %40 = vector.load %arg9[%39, %c0_15] : memref<64x32xf32, #tpu.memory_space<vmem>>, vector<8x32xf32>
    tpu.vector_store %arg9[%39, %c0_15], %38 {strides = array<i32>} : memref<64x32xf32, #tpu.memory_space<vmem>>, vector<8x32xf32>,
    %41 = vector.extract_strided_slice %37 {offsets = [0, 32], sizes = [8, 32], strides = [1, 1]} : vector<8x64xf32> to vector<8x32xf32>
    %42 = arith.index_cast %11 : i32 to index
    %c0_16 = arith.constant 0 : index
    %43 = vector.load %arg10[%42, %c0_16] : memref<64x32xf32, #tpu.memory_space<vmem>>, vector<8x32xf32>
    tpu.vector_store %arg10[%42, %c0_16], %41 {strides = array<i32>} : memref<64x32xf32, #tpu.memory_space<vmem>>, vector<8x32xf32>,
    %c1_i32 = arith.constant 1 : i32
    %c8_i32_17 = arith.constant 8 : i32
    %44 = arith.muli %c1_i32, %c8_i32_17 : i32
    %45 = tpu.assume_multiple %44, 8 : i32
    %c7_i32_18 = arith.constant 7 : i32
    %46 = arith.subi %c7_i32_18, %c1_i32 : i32
    %c8_i32_19 = arith.constant 8 : i32
    %47 = arith.muli %46, %c8_i32_19 : i32
    %48 = tpu.assume_multiple %47, 8 : i32
    %49 = arith.index_cast %45 : i32 to index
    %c0_20 = arith.constant 0 : index
    %50 = vector.load %arg8[%49, %c0_20] : memref<64x192xf32, #tpu.memory_space<vmem>>, vector<8x192xf32>
    %51 = arith.truncf %37 : vector<8x64xf32> to vector<8x64xbf16>
    %cst_21 = arith.constant dense<0.000000e+00> : vector<8x192xf32>
    %52 = tpu.matmul %51, %4, %cst_21 {dimension_numbers = #tpu.dot_dimension_numbers<[1], [0], [0], [1], [0, 0, 1, 1], [], []>} : vector<8x64xbf16>, vector<64x192xbf16>, vector<8x192xf32> -> vector<8x192xf32>
    %53 = vector.extract_strided_slice %50 {offsets = [0, 0], sizes = [8, 128], strides = [1, 1]} : vector<8x192xf32> to vector<8x128xf32>
    %54 = vector.extract_strided_slice %52 {offsets = [0, 0], sizes = [8, 128], strides = [1, 1]} : vector<8x192xf32> to vector<8x128xf32>
    %55 = arith.addf %53, %54 : vector<8x128xf32>
    %56 = arith.negf %55 : vector<8x128xf32>
    %57 = math.exp %56 : vector<8x128xf32>
    %cst_22 = arith.constant 1.000000e+00 : f32
    %58 = vector.broadcast %cst_22 : f32 to vector<8x128xf32>
    %59 = arith.addf %58, %57 : vector<8x128xf32>
    %60 = arith.divf %58, %59 : vector<8x128xf32>
    %61 = vector.extract_strided_slice %60 {offsets = [0, 0], sizes = [8, 64], strides = [1, 1]} : vector<8x128xf32> to vector<8x64xf32>
    %62 = vector.extract_strided_slice %60 {offsets = [0, 64], sizes = [8, 64], strides = [1, 1]} : vector<8x128xf32> to vector<8x64xf32>
    %63 = vector.extract_strided_slice %50 {offsets = [0, 128], sizes = [8, 64], strides = [1, 1]} : vector<8x192xf32> to vector<8x64xf32>
    %64 = vector.extract_strided_slice %52 {offsets = [0, 128], sizes = [8, 64], strides = [1, 1]} : vector<8x192xf32> to vector<8x64xf32>
    %65 = vector.broadcast %5 : vector<1x64xf32> to vector<8x64xf32>
    %66 = arith.addf %64, %65 : vector<8x64xf32>
    %67 = arith.mulf %61, %66 : vector<8x64xf32>
    %68 = arith.addf %63, %67 : vector<8x64xf32>
    %69 = math.tanh %68 : vector<8x64xf32>
    %cst_23 = arith.constant 1.000000e+00 : f32
    %70 = vector.broadcast %cst_23 : f32 to vector<8x64xf32>
    %71 = arith.subf %70, %62 : vector<8x64xf32>
    %72 = arith.mulf %71, %69 : vector<8x64xf32>
    %73 = arith.mulf %62, %37 : vector<8x64xf32>
    %74 = arith.addf %72, %73 : vector<8x64xf32>
    %75 = vector.extract_strided_slice %74 {offsets = [0, 0], sizes = [8, 32], strides = [1, 1]} : vector<8x64xf32> to vector<8x32xf32>
    %76 = arith.index_cast %45 : i32 to index
    %c0_24 = arith.constant 0 : index
    %77 = vector.load %arg9[%76, %c0_24] : memref<64x32xf32, #tpu.memory_space<vmem>>, vector<8x32xf32>
    tpu.vector_store %arg9[%76, %c0_24], %75 {strides = array<i32>} : memref<64x32xf32, #tpu.memory_space<vmem>>, vector<8x32xf32>,
    %78 = vector.extract_strided_slice %74 {offsets = [0, 32], sizes = [8, 32], strides = [1, 1]} : vector<8x64xf32> to vector<8x32xf32>
    %79 = arith.index_cast %48 : i32 to index
    %c0_25 = arith.constant 0 : index
    %80 = vector.load %arg10[%79, %c0_25] : memref<64x32xf32, #tpu.memory_space<vmem>>, vector<8x32xf32>
    tpu.vector_store %arg10[%79, %c0_25], %78 {strides = array<i32>} : memref<64x32xf32, #tpu.memory_space<vmem>>, vector<8x32xf32>,
    %c2_i32 = arith.constant 2 : i32
    %c8_i32_26 = arith.constant 8 : i32
    %81 = arith.muli %c2_i32, %c8_i32_26 : i32
    %82 = tpu.assume_multiple %81, 8 : i32
    %c7_i32_27 = arith.constant 7 : i32
    %83 = arith.subi %c7_i32_27, %c2_i32 : i32
    %c8_i32_28 = arith.constant 8 : i32
    %84 = arith.muli %83, %c8_i32_28 : i32
    %85 = tpu.assume_multiple %84, 8 : i32
    %86 = arith.index_cast %82 : i32 to index
    %c0_29 = arith.constant 0 : index
    %87 = vector.load %arg8[%86, %c0_29] : memref<64x192xf32, #tpu.memory_space<vmem>>, vector<8x192xf32>
    %88 = arith.truncf %74 : vector<8x64xf32> to vector<8x64xbf16>
    %cst_30 = arith.constant dense<0.000000e+00> : vector<8x192xf32>
    %89 = tpu.matmul %88, %4, %cst_30 {dimension_numbers = #tpu.dot_dimension_numbers<[1], [0], [0], [1], [0, 0, 1, 1], [], []>} : vector<8x64xbf16>, vector<64x192xbf16>, vector<8x192xf32> -> vector<8x192xf32>
    %90 = vector.extract_strided_slice %87 {offsets = [0, 0], sizes = [8, 128], strides = [1, 1]} : vector<8x192xf32> to vector<8x128xf32>
    %91 = vector.extract_strided_slice %89 {offsets = [0, 0], sizes = [8, 128], strides = [1, 1]} : vector<8x192xf32> to vector<8x128xf32>
    %92 = arith.addf %90, %91 : vector<8x128xf32>
    %93 = arith.negf %92 : vector<8x128xf32>
    %94 = math.exp %93 : vector<8x128xf32>
    %cst_31 = arith.constant 1.000000e+00 : f32
    %95 = vector.broadcast %cst_31 : f32 to vector<8x128xf32>
    %96 = arith.addf %95, %94 : vector<8x128xf32>
    %97 = arith.divf %95, %96 : vector<8x128xf32>
    %98 = vector.extract_strided_slice %97 {offsets = [0, 0], sizes = [8, 64], strides = [1, 1]} : vector<8x128xf32> to vector<8x64xf32>
    %99 = vector.extract_strided_slice %97 {offsets = [0, 64], sizes = [8, 64], strides = [1, 1]} : vector<8x128xf32> to vector<8x64xf32>
    %100 = vector.extract_strided_slice %87 {offsets = [0, 128], sizes = [8, 64], strides = [1, 1]} : vector<8x192xf32> to vector<8x64xf32>
    %101 = vector.extract_strided_slice %89 {offsets = [0, 128], sizes = [8, 64], strides = [1, 1]} : vector<8x192xf32> to vector<8x64xf32>
    %102 = vector.broadcast %5 : vector<1x64xf32> to vector<8x64xf32>
    %103 = arith.addf %101, %102 : vector<8x64xf32>
    %104 = arith.mulf %98, %103 : vector<8x64xf32>
    %105 = arith.addf %100, %104 : vector<8x64xf32>
    %106 = math.tanh %105 : vector<8x64xf32>
    %cst_32 = arith.constant 1.000000e+00 : f32
    %107 = vector.broadcast %cst_32 : f32 to vector<8x64xf32>
    %108 = arith.subf %107, %99 : vector<8x64xf32>
    %109 = arith.mulf %108, %106 : vector<8x64xf32>
    %110 = arith.mulf %99, %74 : vector<8x64xf32>
    %111 = arith.addf %109, %110 : vector<8x64xf32>
    %112 = vector.extract_strided_slice %111 {offsets = [0, 0], sizes = [8, 32], strides = [1, 1]} : vector<8x64xf32> to vector<8x32xf32>
    %113 = arith.index_cast %82 : i32 to index
    %c0_33 = arith.constant 0 : index
    %114 = vector.load %arg9[%113, %c0_33] : memref<64x32xf32, #tpu.memory_space<vmem>>, vector<8x32xf32>
    tpu.vector_store %arg9[%113, %c0_33], %112 {strides = array<i32>} : memref<64x32xf32, #tpu.memory_space<vmem>>, vector<8x32xf32>,
    %115 = vector.extract_strided_slice %111 {offsets = [0, 32], sizes = [8, 32], strides = [1, 1]} : vector<8x64xf32> to vector<8x32xf32>
    %116 = arith.index_cast %85 : i32 to index
    %c0_34 = arith.constant 0 : index
    %117 = vector.load %arg10[%116, %c0_34] : memref<64x32xf32, #tpu.memory_space<vmem>>, vector<8x32xf32>
    tpu.vector_store %arg10[%116, %c0_34], %115 {strides = array<i32>} : memref<64x32xf32, #tpu.memory_space<vmem>>, vector<8x32xf32>,
    %c3_i32 = arith.constant 3 : i32
    %c8_i32_35 = arith.constant 8 : i32
    %118 = arith.muli %c3_i32, %c8_i32_35 : i32
    %119 = tpu.assume_multiple %118, 8 : i32
    %c7_i32_36 = arith.constant 7 : i32
    %120 = arith.subi %c7_i32_36, %c3_i32 : i32
    %c8_i32_37 = arith.constant 8 : i32
    %121 = arith.muli %120, %c8_i32_37 : i32
    %122 = tpu.assume_multiple %121, 8 : i32
    %123 = arith.index_cast %119 : i32 to index
    %c0_38 = arith.constant 0 : index
    %124 = vector.load %arg8[%123, %c0_38] : memref<64x192xf32, #tpu.memory_space<vmem>>, vector<8x192xf32>
    %125 = arith.truncf %111 : vector<8x64xf32> to vector<8x64xbf16>
    %cst_39 = arith.constant dense<0.000000e+00> : vector<8x192xf32>
    %126 = tpu.matmul %125, %4, %cst_39 {dimension_numbers = #tpu.dot_dimension_numbers<[1], [0], [0], [1], [0, 0, 1, 1], [], []>} : vector<8x64xbf16>, vector<64x192xbf16>, vector<8x192xf32> -> vector<8x192xf32>
    %127 = vector.extract_strided_slice %124 {offsets = [0, 0], sizes = [8, 128], strides = [1, 1]} : vector<8x192xf32> to vector<8x128xf32>
    %128 = vector.extract_strided_slice %126 {offsets = [0, 0], sizes = [8, 128], strides = [1, 1]} : vector<8x192xf32> to vector<8x128xf32>
    %129 = arith.addf %127, %128 : vector<8x128xf32>
    %130 = arith.negf %129 : vector<8x128xf32>
    %131 = math.exp %130 : vector<8x128xf32>
    %cst_40 = arith.constant 1.000000e+00 : f32
    %132 = vector.broadcast %cst_40 : f32 to vector<8x128xf32>
    %133 = arith.addf %132, %131 : vector<8x128xf32>
    %134 = arith.divf %132, %133 : vector<8x128xf32>
    %135 = vector.extract_strided_slice %134 {offsets = [0, 0], sizes = [8, 64], strides = [1, 1]} : vector<8x128xf32> to vector<8x64xf32>
    %136 = vector.extract_strided_slice %134 {offsets = [0, 64], sizes = [8, 64], strides = [1, 1]} : vector<8x128xf32> to vector<8x64xf32>
    %137 = vector.extract_strided_slice %124 {offsets = [0, 128], sizes = [8, 64], strides = [1, 1]} : vector<8x192xf32> to vector<8x64xf32>
    %138 = vector.extract_strided_slice %126 {offsets = [0, 128], sizes = [8, 64], strides = [1, 1]} : vector<8x192xf32> to vector<8x64xf32>
    %139 = vector.broadcast %5 : vector<1x64xf32> to vector<8x64xf32>
    %140 = arith.addf %138, %139 : vector<8x64xf32>
    %141 = arith.mulf %135, %140 : vector<8x64xf32>
    %142 = arith.addf %137, %141 : vector<8x64xf32>
    %143 = math.tanh %142 : vector<8x64xf32>
    %cst_41 = arith.constant 1.000000e+00 : f32
    %144 = vector.broadcast %cst_41 : f32 to vector<8x64xf32>
    %145 = arith.subf %144, %136 : vector<8x64xf32>
    %146 = arith.mulf %145, %143 : vector<8x64xf32>
    %147 = arith.mulf %136, %111 : vector<8x64xf32>
    %148 = arith.addf %146, %147 : vector<8x64xf32>
    %149 = vector.extract_strided_slice %148 {offsets = [0, 0], sizes = [8, 32], strides = [1, 1]} : vector<8x64xf32> to vector<8x32xf32>
    %150 = arith.index_cast %119 : i32 to index
    %c0_42 = arith.constant 0 : index
    %151 = vector.load %arg9[%150, %c0_42] : memref<64x32xf32, #tpu.memory_space<vmem>>, vector<8x32xf32>
    tpu.vector_store %arg9[%150, %c0_42], %149 {strides = array<i32>} : memref<64x32xf32, #tpu.memory_space<vmem>>, vector<8x32xf32>,
    %152 = vector.extract_strided_slice %148 {offsets = [0, 32], sizes = [8, 32], strides = [1, 1]} : vector<8x64xf32> to vector<8x32xf32>
    %153 = arith.index_cast %122 : i32 to index
    %c0_43 = arith.constant 0 : index
    %154 = vector.load %arg10[%153, %c0_43] : memref<64x32xf32, #tpu.memory_space<vmem>>, vector<8x32xf32>
    tpu.vector_store %arg10[%153, %c0_43], %152 {strides = array<i32>} : memref<64x32xf32, #tpu.memory_space<vmem>>, vector<8x32xf32>,
    %c4_i32 = arith.constant 4 : i32
    %c8_i32_44 = arith.constant 8 : i32
    %155 = arith.muli %c4_i32, %c8_i32_44 : i32
    %156 = tpu.assume_multiple %155, 8 : i32
    %c7_i32_45 = arith.constant 7 : i32
    %157 = arith.subi %c7_i32_45, %c4_i32 : i32
    %c8_i32_46 = arith.constant 8 : i32
    %158 = arith.muli %157, %c8_i32_46 : i32
    %159 = tpu.assume_multiple %158, 8 : i32
    %160 = arith.index_cast %156 : i32 to index
    %c0_47 = arith.constant 0 : index
    %161 = vector.load %arg8[%160, %c0_47] : memref<64x192xf32, #tpu.memory_space<vmem>>, vector<8x192xf32>
    %162 = arith.truncf %148 : vector<8x64xf32> to vector<8x64xbf16>
    %cst_48 = arith.constant dense<0.000000e+00> : vector<8x192xf32>
    %163 = tpu.matmul %162, %4, %cst_48 {dimension_numbers = #tpu.dot_dimension_numbers<[1], [0], [0], [1], [0, 0, 1, 1], [], []>} : vector<8x64xbf16>, vector<64x192xbf16>, vector<8x192xf32> -> vector<8x192xf32>
    %164 = vector.extract_strided_slice %161 {offsets = [0, 0], sizes = [8, 128], strides = [1, 1]} : vector<8x192xf32> to vector<8x128xf32>
    %165 = vector.extract_strided_slice %163 {offsets = [0, 0], sizes = [8, 128], strides = [1, 1]} : vector<8x192xf32> to vector<8x128xf32>
    %166 = arith.addf %164, %165 : vector<8x128xf32>
    %167 = arith.negf %166 : vector<8x128xf32>
    %168 = math.exp %167 : vector<8x128xf32>
    %cst_49 = arith.constant 1.000000e+00 : f32
    %169 = vector.broadcast %cst_49 : f32 to vector<8x128xf32>
    %170 = arith.addf %169, %168 : vector<8x128xf32>
    %171 = arith.divf %169, %170 : vector<8x128xf32>
    %172 = vector.extract_strided_slice %171 {offsets = [0, 0], sizes = [8, 64], strides = [1, 1]} : vector<8x128xf32> to vector<8x64xf32>
    %173 = vector.extract_strided_slice %171 {offsets = [0, 64], sizes = [8, 64], strides = [1, 1]} : vector<8x128xf32> to vector<8x64xf32>
    %174 = vector.extract_strided_slice %161 {offsets = [0, 128], sizes = [8, 64], strides = [1, 1]} : vector<8x192xf32> to vector<8x64xf32>
    %175 = vector.extract_strided_slice %163 {offsets = [0, 128], sizes = [8, 64], strides = [1, 1]} : vector<8x192xf32> to vector<8x64xf32>
    %176 = vector.broadcast %5 : vector<1x64xf32> to vector<8x64xf32>
    %177 = arith.addf %175, %176 : vector<8x64xf32>
    %178 = arith.mulf %172, %177 : vector<8x64xf32>
    %179 = arith.addf %174, %178 : vector<8x64xf32>
    %180 = math.tanh %179 : vector<8x64xf32>
    %cst_50 = arith.constant 1.000000e+00 : f32
    %181 = vector.broadcast %cst_50 : f32 to vector<8x64xf32>
    %182 = arith.subf %181, %173 : vector<8x64xf32>
    %183 = arith.mulf %182, %180 : vector<8x64xf32>
    %184 = arith.mulf %173, %148 : vector<8x64xf32>
    %185 = arith.addf %183, %184 : vector<8x64xf32>
    %186 = vector.extract_strided_slice %185 {offsets = [0, 0], sizes = [8, 32], strides = [1, 1]} : vector<8x64xf32> to vector<8x32xf32>
    %187 = arith.index_cast %156 : i32 to index
    %c0_51 = arith.constant 0 : index
    %188 = vector.load %arg9[%187, %c0_51] : memref<64x32xf32, #tpu.memory_space<vmem>>, vector<8x32xf32>
    tpu.vector_store %arg9[%187, %c0_51], %186 {strides = array<i32>} : memref<64x32xf32, #tpu.memory_space<vmem>>, vector<8x32xf32>,
    %189 = vector.extract_strided_slice %185 {offsets = [0, 32], sizes = [8, 32], strides = [1, 1]} : vector<8x64xf32> to vector<8x32xf32>
    %190 = arith.index_cast %159 : i32 to index
    %c0_52 = arith.constant 0 : index
    %191 = vector.load %arg10[%190, %c0_52] : memref<64x32xf32, #tpu.memory_space<vmem>>, vector<8x32xf32>
    tpu.vector_store %arg10[%190, %c0_52], %189 {strides = array<i32>} : memref<64x32xf32, #tpu.memory_space<vmem>>, vector<8x32xf32>,
    %c5_i32 = arith.constant 5 : i32
    %c8_i32_53 = arith.constant 8 : i32
    %192 = arith.muli %c5_i32, %c8_i32_53 : i32
    %193 = tpu.assume_multiple %192, 8 : i32
    %c7_i32_54 = arith.constant 7 : i32
    %194 = arith.subi %c7_i32_54, %c5_i32 : i32
    %c8_i32_55 = arith.constant 8 : i32
    %195 = arith.muli %194, %c8_i32_55 : i32
    %196 = tpu.assume_multiple %195, 8 : i32
    %197 = arith.index_cast %193 : i32 to index
    %c0_56 = arith.constant 0 : index
    %198 = vector.load %arg8[%197, %c0_56] : memref<64x192xf32, #tpu.memory_space<vmem>>, vector<8x192xf32>
    %199 = arith.truncf %185 : vector<8x64xf32> to vector<8x64xbf16>
    %cst_57 = arith.constant dense<0.000000e+00> : vector<8x192xf32>
    %200 = tpu.matmul %199, %4, %cst_57 {dimension_numbers = #tpu.dot_dimension_numbers<[1], [0], [0], [1], [0, 0, 1, 1], [], []>} : vector<8x64xbf16>, vector<64x192xbf16>, vector<8x192xf32> -> vector<8x192xf32>
    %201 = vector.extract_strided_slice %198 {offsets = [0, 0], sizes = [8, 128], strides = [1, 1]} : vector<8x192xf32> to vector<8x128xf32>
    %202 = vector.extract_strided_slice %200 {offsets = [0, 0], sizes = [8, 128], strides = [1, 1]} : vector<8x192xf32> to vector<8x128xf32>
    %203 = arith.addf %201, %202 : vector<8x128xf32>
    %204 = arith.negf %203 : vector<8x128xf32>
    %205 = math.exp %204 : vector<8x128xf32>
    %cst_58 = arith.constant 1.000000e+00 : f32
    %206 = vector.broadcast %cst_58 : f32 to vector<8x128xf32>
    %207 = arith.addf %206, %205 : vector<8x128xf32>
    %208 = arith.divf %206, %207 : vector<8x128xf32>
    %209 = vector.extract_strided_slice %208 {offsets = [0, 0], sizes = [8, 64], strides = [1, 1]} : vector<8x128xf32> to vector<8x64xf32>
    %210 = vector.extract_strided_slice %208 {offsets = [0, 64], sizes = [8, 64], strides = [1, 1]} : vector<8x128xf32> to vector<8x64xf32>
    %211 = vector.extract_strided_slice %198 {offsets = [0, 128], sizes = [8, 64], strides = [1, 1]} : vector<8x192xf32> to vector<8x64xf32>
    %212 = vector.extract_strided_slice %200 {offsets = [0, 128], sizes = [8, 64], strides = [1, 1]} : vector<8x192xf32> to vector<8x64xf32>
    %213 = vector.broadcast %5 : vector<1x64xf32> to vector<8x64xf32>
    %214 = arith.addf %212, %213 : vector<8x64xf32>
    %215 = arith.mulf %209, %214 : vector<8x64xf32>
    %216 = arith.addf %211, %215 : vector<8x64xf32>
    %217 = math.tanh %216 : vector<8x64xf32>
    %cst_59 = arith.constant 1.000000e+00 : f32
    %218 = vector.broadcast %cst_59 : f32 to vector<8x64xf32>
    %219 = arith.subf %218, %210 : vector<8x64xf32>
    %220 = arith.mulf %219, %217 : vector<8x64xf32>
    %221 = arith.mulf %210, %185 : vector<8x64xf32>
    %222 = arith.addf %220, %221 : vector<8x64xf32>
    %223 = vector.extract_strided_slice %222 {offsets = [0, 0], sizes = [8, 32], strides = [1, 1]} : vector<8x64xf32> to vector<8x32xf32>
    %224 = arith.index_cast %193 : i32 to index
    %c0_60 = arith.constant 0 : index
    %225 = vector.load %arg9[%224, %c0_60] : memref<64x32xf32, #tpu.memory_space<vmem>>, vector<8x32xf32>
    tpu.vector_store %arg9[%224, %c0_60], %223 {strides = array<i32>} : memref<64x32xf32, #tpu.memory_space<vmem>>, vector<8x32xf32>,
    %226 = vector.extract_strided_slice %222 {offsets = [0, 32], sizes = [8, 32], strides = [1, 1]} : vector<8x64xf32> to vector<8x32xf32>
    %227 = arith.index_cast %196 : i32 to index
    %c0_61 = arith.constant 0 : index
    %228 = vector.load %arg10[%227, %c0_61] : memref<64x32xf32, #tpu.memory_space<vmem>>, vector<8x32xf32>
    tpu.vector_store %arg10[%227, %c0_61], %226 {strides = array<i32>} : memref<64x32xf32, #tpu.memory_space<vmem>>, vector<8x32xf32>,
    %c6_i32 = arith.constant 6 : i32
    %c8_i32_62 = arith.constant 8 : i32
    %229 = arith.muli %c6_i32, %c8_i32_62 : i32
    %230 = tpu.assume_multiple %229, 8 : i32
    %c7_i32_63 = arith.constant 7 : i32
    %231 = arith.subi %c7_i32_63, %c6_i32 : i32
    %c8_i32_64 = arith.constant 8 : i32
    %232 = arith.muli %231, %c8_i32_64 : i32
    %233 = tpu.assume_multiple %232, 8 : i32
    %234 = arith.index_cast %230 : i32 to index
    %c0_65 = arith.constant 0 : index
    %235 = vector.load %arg8[%234, %c0_65] : memref<64x192xf32, #tpu.memory_space<vmem>>, vector<8x192xf32>
    %236 = arith.truncf %222 : vector<8x64xf32> to vector<8x64xbf16>
    %cst_66 = arith.constant dense<0.000000e+00> : vector<8x192xf32>
    %237 = tpu.matmul %236, %4, %cst_66 {dimension_numbers = #tpu.dot_dimension_numbers<[1], [0], [0], [1], [0, 0, 1, 1], [], []>} : vector<8x64xbf16>, vector<64x192xbf16>, vector<8x192xf32> -> vector<8x192xf32>
    %238 = vector.extract_strided_slice %235 {offsets = [0, 0], sizes = [8, 128], strides = [1, 1]} : vector<8x192xf32> to vector<8x128xf32>
    %239 = vector.extract_strided_slice %237 {offsets = [0, 0], sizes = [8, 128], strides = [1, 1]} : vector<8x192xf32> to vector<8x128xf32>
    %240 = arith.addf %238, %239 : vector<8x128xf32>
    %241 = arith.negf %240 : vector<8x128xf32>
    %242 = math.exp %241 : vector<8x128xf32>
    %cst_67 = arith.constant 1.000000e+00 : f32
    %243 = vector.broadcast %cst_67 : f32 to vector<8x128xf32>
    %244 = arith.addf %243, %242 : vector<8x128xf32>
    %245 = arith.divf %243, %244 : vector<8x128xf32>
    %246 = vector.extract_strided_slice %245 {offsets = [0, 0], sizes = [8, 64], strides = [1, 1]} : vector<8x128xf32> to vector<8x64xf32>
    %247 = vector.extract_strided_slice %245 {offsets = [0, 64], sizes = [8, 64], strides = [1, 1]} : vector<8x128xf32> to vector<8x64xf32>
    %248 = vector.extract_strided_slice %235 {offsets = [0, 128], sizes = [8, 64], strides = [1, 1]} : vector<8x192xf32> to vector<8x64xf32>
    %249 = vector.extract_strided_slice %237 {offsets = [0, 128], sizes = [8, 64], strides = [1, 1]} : vector<8x192xf32> to vector<8x64xf32>
    %250 = vector.broadcast %5 : vector<1x64xf32> to vector<8x64xf32>
    %251 = arith.addf %249, %250 : vector<8x64xf32>
    %252 = arith.mulf %246, %251 : vector<8x64xf32>
    %253 = arith.addf %248, %252 : vector<8x64xf32>
    %254 = math.tanh %253 : vector<8x64xf32>
    %cst_68 = arith.constant 1.000000e+00 : f32
    %255 = vector.broadcast %cst_68 : f32 to vector<8x64xf32>
    %256 = arith.subf %255, %247 : vector<8x64xf32>
    %257 = arith.mulf %256, %254 : vector<8x64xf32>
    %258 = arith.mulf %247, %222 : vector<8x64xf32>
    %259 = arith.addf %257, %258 : vector<8x64xf32>
    %260 = vector.extract_strided_slice %259 {offsets = [0, 0], sizes = [8, 32], strides = [1, 1]} : vector<8x64xf32> to vector<8x32xf32>
    %261 = arith.index_cast %230 : i32 to index
    %c0_69 = arith.constant 0 : index
    %262 = vector.load %arg9[%261, %c0_69] : memref<64x32xf32, #tpu.memory_space<vmem>>, vector<8x32xf32>
    tpu.vector_store %arg9[%261, %c0_69], %260 {strides = array<i32>} : memref<64x32xf32, #tpu.memory_space<vmem>>, vector<8x32xf32>,
    %263 = vector.extract_strided_slice %259 {offsets = [0, 32], sizes = [8, 32], strides = [1, 1]} : vector<8x64xf32> to vector<8x32xf32>
    %264 = arith.index_cast %233 : i32 to index
    %c0_70 = arith.constant 0 : index
    %265 = vector.load %arg10[%264, %c0_70] : memref<64x32xf32, #tpu.memory_space<vmem>>, vector<8x32xf32>
    tpu.vector_store %arg10[%264, %c0_70], %263 {strides = array<i32>} : memref<64x32xf32, #tpu.memory_space<vmem>>, vector<8x32xf32>,
    %c7_i32_71 = arith.constant 7 : i32
    %c8_i32_72 = arith.constant 8 : i32
    %266 = arith.muli %c7_i32_71, %c8_i32_72 : i32
    %267 = tpu.assume_multiple %266, 8 : i32
    %c7_i32_73 = arith.constant 7 : i32
    %268 = arith.subi %c7_i32_73, %c7_i32_71 : i32
    %c8_i32_74 = arith.constant 8 : i32
    %269 = arith.muli %268, %c8_i32_74 : i32
    %270 = tpu.assume_multiple %269, 8 : i32
    %271 = arith.index_cast %267 : i32 to index
    %c0_75 = arith.constant 0 : index
    %272 = vector.load %arg8[%271, %c0_75] : memref<64x192xf32, #tpu.memory_space<vmem>>, vector<8x192xf32>
    %273 = arith.truncf %259 : vector<8x64xf32> to vector<8x64xbf16>
    %cst_76 = arith.constant dense<0.000000e+00> : vector<8x192xf32>
    %274 = tpu.matmul %273, %4, %cst_76 {dimension_numbers = #tpu.dot_dimension_numbers<[1], [0], [0], [1], [0, 0, 1, 1], [], []>} : vector<8x64xbf16>, vector<64x192xbf16>, vector<8x192xf32> -> vector<8x192xf32>
    %275 = vector.extract_strided_slice %272 {offsets = [0, 0], sizes = [8, 128], strides = [1, 1]} : vector<8x192xf32> to vector<8x128xf32>
    %276 = vector.extract_strided_slice %274 {offsets = [0, 0], sizes = [8, 128], strides = [1, 1]} : vector<8x192xf32> to vector<8x128xf32>
    %277 = arith.addf %275, %276 : vector<8x128xf32>
    %278 = arith.negf %277 : vector<8x128xf32>
    %279 = math.exp %278 : vector<8x128xf32>
    %cst_77 = arith.constant 1.000000e+00 : f32
    %280 = vector.broadcast %cst_77 : f32 to vector<8x128xf32>
    %281 = arith.addf %280, %279 : vector<8x128xf32>
    %282 = arith.divf %280, %281 : vector<8x128xf32>
    %283 = vector.extract_strided_slice %282 {offsets = [0, 0], sizes = [8, 64], strides = [1, 1]} : vector<8x128xf32> to vector<8x64xf32>
    %284 = vector.extract_strided_slice %282 {offsets = [0, 64], sizes = [8, 64], strides = [1, 1]} : vector<8x128xf32> to vector<8x64xf32>
    %285 = vector.extract_strided_slice %272 {offsets = [0, 128], sizes = [8, 64], strides = [1, 1]} : vector<8x192xf32> to vector<8x64xf32>
    %286 = vector.extract_strided_slice %274 {offsets = [0, 128], sizes = [8, 64], strides = [1, 1]} : vector<8x192xf32> to vector<8x64xf32>
    %287 = vector.broadcast %5 : vector<1x64xf32> to vector<8x64xf32>
    %288 = arith.addf %286, %287 : vector<8x64xf32>
    %289 = arith.mulf %283, %288 : vector<8x64xf32>
    %290 = arith.addf %285, %289 : vector<8x64xf32>
    %291 = math.tanh %290 : vector<8x64xf32>
    %cst_78 = arith.constant 1.000000e+00 : f32
    %292 = vector.broadcast %cst_78 : f32 to vector<8x64xf32>
    %293 = arith.subf %292, %284 : vector<8x64xf32>
    %294 = arith.mulf %293, %291 : vector<8x64xf32>
    %295 = arith.mulf %284, %259 : vector<8x64xf32>
    %296 = arith.addf %294, %295 : vector<8x64xf32>
    %297 = vector.extract_strided_slice %296 {offsets = [0, 0], sizes = [8, 32], strides = [1, 1]} : vector<8x64xf32> to vector<8x32xf32>
    %298 = arith.index_cast %267 : i32 to index
    %c0_79 = arith.constant 0 : index
    %299 = vector.load %arg9[%298, %c0_79] : memref<64x32xf32, #tpu.memory_space<vmem>>, vector<8x32xf32>
    tpu.vector_store %arg9[%298, %c0_79], %297 {strides = array<i32>} : memref<64x32xf32, #tpu.memory_space<vmem>>, vector<8x32xf32>,
    %300 = vector.extract_strided_slice %296 {offsets = [0, 32], sizes = [8, 32], strides = [1, 1]} : vector<8x64xf32> to vector<8x32xf32>
    %301 = arith.index_cast %270 : i32 to index
    %c0_80 = arith.constant 0 : index
    %302 = vector.load %arg10[%301, %c0_80] : memref<64x32xf32, #tpu.memory_space<vmem>>, vector<8x32xf32>
    tpu.vector_store %arg10[%301, %c0_80], %300 {strides = array<i32>} : memref<64x32xf32, #tpu.memory_space<vmem>>, vector<8x32xf32>,
    %c8_i32_81 = arith.constant 8 : i32
    %c0_82 = arith.constant 0 : index
    %c0_83 = arith.constant 0 : index
    %303 = vector.load %arg9[%c0_82, %c0_83] : memref<64x32xf32, #tpu.memory_space<vmem>>, vector<64x32xf32>
    %304 = arith.truncf %303 : vector<64x32xf32> to vector<64x32xbf16>
    %c0_84 = arith.constant 0 : index
    %c0_85 = arith.constant 0 : index
    %c0_86 = arith.constant 0 : index
    %305 = vector.load %arg5[%c0_84, %c0_85, %c0_86] : memref<2x32x32xbf16, #tpu.memory_space<vmem>>, vector<1x32x32xbf16>
    %306 = vector.shape_cast %305 : vector<1x32x32xbf16> to vector<32x32xbf16>
    %cst_87 = arith.constant dense<0.000000e+00> : vector<64x32xf32>
    %307 = tpu.matmul %304, %306, %cst_87 {dimension_numbers = #tpu.dot_dimension_numbers<[1], [0], [0], [1], [0, 0, 1, 1], [], []>} : vector<64x32xbf16>, vector<32x32xbf16>, vector<64x32xf32> -> vector<64x32xf32>
    %c0_88 = arith.constant 0 : index
    %c0_89 = arith.constant 0 : index
    %308 = vector.load %arg10[%c0_88, %c0_89] : memref<64x32xf32, #tpu.memory_space<vmem>>, vector<64x32xf32>
    %309 = arith.truncf %308 : vector<64x32xf32> to vector<64x32xbf16>
    %c1 = arith.constant 1 : index
    %c0_90 = arith.constant 0 : index
    %c0_91 = arith.constant 0 : index
    %310 = vector.load %arg5[%c1, %c0_90, %c0_91] : memref<2x32x32xbf16, #tpu.memory_space<vmem>>, vector<1x32x32xbf16>
    %311 = vector.shape_cast %310 : vector<1x32x32xbf16> to vector<32x32xbf16>
    %cst_92 = arith.constant dense<0.000000e+00> : vector<64x32xf32>
    %312 = tpu.matmul %309, %311, %cst_92 {dimension_numbers = #tpu.dot_dimension_numbers<[1], [0], [0], [1], [0, 0, 1, 1], [], []>} : vector<64x32xbf16>, vector<32x32xbf16>, vector<64x32xf32> -> vector<64x32xf32>
    %313 = arith.addf %307, %312 : vector<64x32xf32>
    %c0_93 = arith.constant 0 : index
    %c0_94 = arith.constant 0 : index
    %314 = vector.load %arg6[%c0_93, %c0_94] : memref<1x32xf32, #tpu.memory_space<vmem>>, vector<1x32xf32>
    %315 = vector.broadcast %314 : vector<1x32xf32> to vector<64x32xf32>
    %316 = arith.addf %313, %315 : vector<64x32xf32>
    %c0_95 = arith.constant 0 : index
    %c0_96 = arith.constant 0 : index
    %317 = vector.load %arg7[%c0_95, %c0_96] : memref<64x32xf32, #tpu.memory_space<vmem>>, vector<64x32xf32>
    tpu.vector_store %arg7[%c0_95, %c0_96], %316 {strides = array<i32>} : memref<64x32xf32, #tpu.memory_space<vmem>>, vector<64x32xf32>,
    return
  }
  func.func @transform_0(%arg0: i32) -> (i32, i32) {
    %c0_i32 = arith.constant 0 : i32
    %c0_i32_0 = arith.constant 0 : i32
    %c0_i32_1 = arith.constant 0 : i32
    return %c0_i32, %c0_i32_0 : i32, i32
  }
  func.func @transform_1(%arg0: i32) -> (i32, i32) {
    %c0_i32 = arith.constant 0 : i32
    %c0_i32_0 = arith.constant 0 : i32
    %c0_i32_1 = arith.constant 0 : i32
    return %c0_i32, %c0_i32_0 : i32, i32
  }
  func.func @transform_2(%arg0: i32) -> (i32, i32) {
    %c0_i32 = arith.constant 0 : i32
    %c0_i32_0 = arith.constant 0 : i32
    %c0_i32_1 = arith.constant 0 : i32
    return %c0_i32, %c0_i32_0 : i32, i32
  }
  func.func @transform_3(%arg0: i32) -> (i32, i32) {
    %c0_i32 = arith.constant 0 : i32
    %c0_i32_0 = arith.constant 0 : i32
    %c0_i32_1 = arith.constant 0 : i32
    return %c0_i32, %c0_i32_0 : i32, i32
  }
  func.func @transform_4(%arg0: i32) -> (i32, i32, i32) {
    %c0_i32 = arith.constant 0 : i32
    %c0_i32_0 = arith.constant 0 : i32
    %c0_i32_1 = arith.constant 0 : i32
    %c0_i32_2 = arith.constant 0 : i32
    return %c0_i32, %c0_i32_0, %c0_i32_1 : i32, i32, i32
  }
  func.func @transform_5(%arg0: i32) -> (i32, i32) {
    %c0_i32 = arith.constant 0 : i32
    %c0_i32_0 = arith.constant 0 : i32
    %c0_i32_1 = arith.constant 0 : i32
    return %c0_i32, %c0_i32_0 : i32, i32
  }
  func.func @transform_6(%arg0: i32) -> (i32, i32) {
    %c0_i32 = arith.constant 0 : i32
    %c0_i32_0 = arith.constant 0 : i32
    %c0_i32_1 = arith.constant 0 : i32
    return %c0_i32, %c0_i32_0 : i32, i32
  }
}

</mosaic_0001>

<llo_original>
// kernel: rnn_graph_wrapper_forward.1
$region0: #{rnn_graph_wrapper_forward.1}
  #allocation0 [shape = 'u32[]', space=smem, size = 0x4, offset = 0x4, fixed_abs, tag = 'smem constant byte address 0x4 - core index']
  #allocation1 [shape = 'u32[72,128]{1,0:T(1,128)}', space=vmem, size = 0x9000, scoped, tag = 'internal scratch']
  #allocation2 [shape = 'f32[64,192]{1,0:T(8,128)}', space=vmem, size = 0x10000, scoped, tag = 'scratch operand']
  #allocation3 [shape = 'f32[64,32]{1,0:T(8,128)}', space=vmem, size = 0x8000, scoped, tag = 'scratch operand']
  #allocation4 [shape = 'f32[64,32]{1,0:T(8,128)}', space=vmem, size = 0x8000, scoped, tag = 'scratch operand']
  %s0 = inlined_call_operand.vmem [shape: bf16[64,72], index: 0, kind: input, shape index: {}]
  %s1 = inlined_call_operand.vmem [shape: bf16[72,192], index: 1, kind: input, shape index: {}]
  %s2 = inlined_call_operand.hbm [shape: bf16[64,192], index: 2, kind: input, shape index: {}]
  %s3 = inlined_call_operand.vmem [shape: f32[1,64], index: 3, kind: input, shape index: {}]
  %s4 = inlined_call_operand.vmem [shape: bf16[2,32,32], index: 4, kind: input, shape index: {}]
  %s5 = inlined_call_operand.vmem [shape: f32[1,32], index: 5, kind: input, shape index: {}]
  %s6 = inlined_call_operand.vmem [shape: f32[64,32], index: 6, kind: output, shape index: {}]
  %s7 = sld [smem:[#allocation0]]
  $region38: #{rnn_graph_wrapper_forward.1} parent=0
    _
  %s9 = ssub.s32 1, %s7
  %s10 = scalar_select 0, %s9, %s7
  $region1: #{rnn_graph_wrapper_forward.1} parent=0
    #allocation5 [shape = 'u8[32768]{0}', space=vmem, size = 0x8000, scoped, tag = 'input window, operand 2, single buffered']
    #allocation6 [shape = 's32[1]{0}', space=sflag, size = 0x4, scoped, tag = 'scoped memory for rnn_graph_wrapper_forward.1']
    %11 = vsyncpa [#allocation6], 0
    // Predicated region
    $region2: #{rnn_graph_wrapper_forward.1} parent=1 // pred_check
      _
    $region3: #{rnn_graph_wrapper_forward.1} parent=1 // pred_check_branch
      %13 = sbr.rel (0) target = $region5
    $region4: #{rnn_graph_wrapper_forward.1} parent=1 // pred_region
      _
    $region5: #{rnn_graph_wrapper_forward.1} parent=1 // pred_fallthru
      _
    // Predicated region
    $region6: #{rnn_graph_wrapper_forward.1} parent=1 // pred_check
      _
    $region7: #{rnn_graph_wrapper_forward.1} parent=1 // pred_check_branch
      %15 = sbr.rel (0) target = $region9
    $region8: #{rnn_graph_wrapper_forward.1} parent=1 // pred_region
      _
    $region9: #{rnn_graph_wrapper_forward.1} parent=1 // pred_fallthru
      _
    // Predicated region
    $region10: #{rnn_graph_wrapper_forward.1} parent=1 // pred_check
      _
    $region11: #{rnn_graph_wrapper_forward.1} parent=1 // pred_check_branch
      %17 = sbr.rel (0) target = $region13
    $region12: #{rnn_graph_wrapper_forward.1} parent=1 // pred_region
      %19 = vsyncadd [#allocation6], 0
      %s20 = sshll.u32 %s2, 4
      %s21 = int_to_ptr.hbm [resolvable:$true] %s20
      %s22 = sshll.u32 [#allocation5], 4
      %s23 = int_to_ptr.vmem [resolvable:$true] %s22
      %28 = dma.hbm_to_vmem [thread:$0]  %s21, 1024, %s23, [#allocation6], 128, 128, 8
    $region13: #{rnn_graph_wrapper_forward.1} parent=1 // pred_fallthru
      _
    // Predicated region
    $region14: #{rnn_graph_wrapper_forward.1} parent=1 // pred_check
      _
    $region15: #{rnn_graph_wrapper_forward.1} parent=1 // pred_check_branch
      %30 = sbr.rel (0) target = $region17
    $region16: #{rnn_graph_wrapper_forward.1} parent=1 // pred_region
      _
    $region17: #{rnn_graph_wrapper_forward.1} parent=1 // pred_fallthru
      _
    // Predicated region
    $region18: #{rnn_graph_wrapper_forward.1} parent=1 // pred_check
      _
    $region19: #{rnn_graph_wrapper_forward.1} parent=1 // pred_check_branch
      %32 = sbr.rel (0) target = $region21
    $region20: #{rnn_graph_wrapper_forward.1} parent=1 // pred_region
      _
    $region21: #{rnn_graph_wrapper_forward.1} parent=1 // pred_fallthru
      _
    // Predicated region
    $region22: #{rnn_graph_wrapper_forward.1} parent=1 // pred_check
      _
    $region23: #{rnn_graph_wrapper_forward.1} parent=1 // pred_check_branch
      %34 = sbr.rel (0) target = $region25
    $region24: #{rnn_graph_wrapper_forward.1} parent=1 // pred_region
      _
    $region25: #{rnn_graph_wrapper_forward.1} parent=1 // pred_fallthru
      _
    // Predicated region
    $region26: #{rnn_graph_wrapper_forward.1} parent=1 // pred_check
      _
    $region27: #{rnn_graph_wrapper_forward.1} parent=1 // pred_check_branch
      %36 = sbr.rel (0) target = $region29
    $region28: #{rnn_graph_wrapper_forward.1} parent=1 // pred_region
      %38 = dma.done [#allocation6], 1024
    $region29: #{rnn_graph_wrapper_forward.1} parent=1 // pred_fallthru
      _
    %v40 = vld [vmem:[%s0] sm:$0xf]
    %v41 = vld [vmem:[%s0 + $0x4] sm:$0xf]
    %v42 = vld [vmem:[%s0 + $0x8] sm:$0xf]
    %v43 = vld [vmem:[%s0 + $0xc] sm:$0xf]
    %v44 = vld [vmem:[%s0 + $0x10] sm:$0xf]
    %v45 = vld [vmem:[%s0 + $0x14] sm:$0xf]
    %v46 = vld [vmem:[%s0 + $0x18] sm:$0xf]
    %v47 = vld [vmem:[%s0 + $0x1c] sm:$0xf]
    %v48 = vld [vmem:[%s1] sm:$0xff]
    %v49 = vld [vmem:[%s1 + $0x8] sm:$0xff]
    %v50 = vld [vmem:[%s1 + $0x10] sm:$0xff]
    %v51 = vld [vmem:[%s1 + $0x18] sm:$0xff]
    %v52 = vld [vmem:[%s1 + $0x20] sm:$0xff]
    %v53 = vld [vmem:[%s1 + $0x28] sm:$0xff]
    %v54 = vld [vmem:[%s1 + $0x30] sm:$0xff]
    %v55 = vld [vmem:[%s1 + $0x38] sm:$0xff]
    %v56 = vld [vmem:[%s1 + $0x40] sm:$0xff]
    %v65 = vunpack.c.l.b16 %v40
    %v66 = vunpack.c.l.b16 %v41
    %v67 = vunpack.c.l.b16 %v42
    %v68 = vunpack.c.l.b16 %v43
    %v69 = vunpack.c.l.b16 %v44
    %v70 = vunpack.c.l.b16 %v45
    %v71 = vunpack.c.l.b16 %v46
    %v72 = vunpack.c.l.b16 %v47
    %v73 = vpack.c.b16 %v66, %v65
    %v74 = vpack.c.b16 %v68, %v67
    %v75 = vpack.c.b16 %v70, %v69
    %v76 = vpack.c.b16 %v72, %v71
    %v86 = vunpack.c.l.b16 %v48
    %v87 = vunpack.c.h.b16 %v48
    %v88 = vunpack.c.l.b16 %v49
    %v89 = vunpack.c.h.b16 %v49
    %v90 = vunpack.c.l.b16 %v50
    %v91 = vunpack.c.h.b16 %v50
    %v92 = vunpack.c.l.b16 %v51
    %v93 = vunpack.c.h.b16 %v51
    %v94 = vunpack.c.l.b16 %v52
    %v95 = vunpack.c.h.b16 %v52
    %v96 = vunpack.c.l.b16 %v53
    %v97 = vunpack.c.h.b16 %v53
    %v98 = vunpack.c.l.b16 %v54
    %v99 = vunpack.c.h.b16 %v54
    %v100 = vunpack.c.l.b16 %v55
    %v101 = vunpack.c.h.b16 %v55
    %v102 = vunpack.c.l.b16 %v56
    %v103 = vunpack.c.h.b16 %v56
    %v104 = vpack.c.b16 %v88, %v86
    %v105 = vpack.c.b16 %v89, %v87
    %v106 = vpack.c.b16 %v92, %v90
    %v107 = vpack.c.b16 %v93, %v91
    %v108 = vpack.c.b16 %v96, %v94
    %v109 = vpack.c.b16 %v97, %v95
    %v110 = vpack.c.b16 %v100, %v98
    %v111 = vpack.c.b16 %v101, %v99
    %v112 = vpack.c.b16 %v102, %v102
    %v113 = vpack.c.b16 %v103, %v103
    %vm122 = vcmask 588800
    %v124 = vsel %vm122, %v73, 0
    %v127 = vsel %vm122, %v74, 0
    %v130 = vsel %vm122, %v75, 0
    %v133 = vsel %vm122, %v76, 0
    %vm135 = vcmask 1043456
    %v137 = vsel %vm135, %v112, 0
    %v140 = vsel %vm135, %v113, 0
    %142 = vmatpush.bf16.msra.mxu0 0
    %143 = vmatpush.bf16.msra.mxu0 0
    %144 = vmatpush.bf16.msra.mxu0 0
    %145 = vmatpush.bf16.msra.mxu0 %v137
    %146 = vmatpush.bf16.msra.mxu0 %v110
    %147 = vmatpush.bf16.msra.mxu0 %v108
    %148 = vmatpush.bf16.msra.mxu0 %v106
    %149 = vmatpush.bf16.msra.mxu0 %v104
    %150 = vmatmul.bf16.gmra.mxu0 %v124
    %v151 = vpop.f32.mrf.mxu0
    %v152 = vadd.f32 0.0, %v151
    %v153 = vpop.f32.mrf.mxu0
    %v154 = vadd.f32 0.0, %v153
    %155 = vmatmul.bf16.gmra.mxu0 %v127
    %v156 = vpop.f32.mrf.mxu0
    %v157 = vadd.f32 0.0, %v156
    %v158 = vpop.f32.mrf.mxu0
    %v159 = vadd.f32 0.0, %v158
    %160 = vmatmul.bf16.gmra.mxu0 %v130
    %v161 = vpop.f32.mrf.mxu0
    %v162 = vadd.f32 0.0, %v161
    %v163 = vpop.f32.mrf.mxu0
    %v164 = vadd.f32 0.0, %v163
    %165 = vmatmul.bf16.gmra.mxu0 %v133
    %v166 = vpop.f32.mrf.mxu0
    %v167 = vadd.f32 0.0, %v166
    %v168 = vpop.f32.mrf.mxu0
    %v169 = vadd.f32 0.0, %v168
    %170 = vdwg.mxu0
    %171 = vmatpush.bf16.msra.mxu0 0
    %172 = vmatpush.bf16.msra.mxu0 0
    %173 = vmatpush.bf16.msra.mxu0 0
    %174 = vmatpush.bf16.msra.mxu0 %v140
    %175 = vmatpush.bf16.msra.mxu0 %v111
    %176 = vmatpush.bf16.msra.mxu0 %v109
    %177 = vmatpush.bf16.msra.mxu0 %v107
    %178 = vmatpush.bf16.msra.mxu0 %v105
    %179 = vmatmul.bf16.gmra.mxu0 %v124
    %v180 = vpop.f32.mrf.mxu0
    %v181 = vadd.f32 0.0, %v180
    %v182 = vpop.f32.mrf.mxu0
    %v183 = vadd.f32 0.0, %v182
    %184 = vmatmul.bf16.gmra.mxu0 %v127
    %v185 = vpop.f32.mrf.mxu0
    %v186 = vadd.f32 0.0, %v185
    %v187 = vpop.f32.mrf.mxu0
    %v188 = vadd.f32 0.0, %v187
    %189 = vmatmul.bf16.gmra.mxu0 %v130
    %v190 = vpop.f32.mrf.mxu0
    %v191 = vadd.f32 0.0, %v190
    %v192 = vpop.f32.mrf.mxu0
    %v193 = vadd.f32 0.0, %v192
    %194 = vmatmul.bf16.gmra.mxu0 %v133
    %v195 = vpop.f32.mrf.mxu0
    %v196 = vadd.f32 0.0, %v195
    %v197 = vpop.f32.mrf.mxu0
    %v198 = vadd.f32 0.0, %v197
    %199 = vdwg.mxu0
    %200 = vst [vmem:[#allocation2] sm:$0xff] %v152
    %vm201 = vcmask 523264
    %202 = vst.msk [vmem:[#allocation2 + $0x8] sm:$0xff] %vm201, %v181
    %203 = vst [vmem:[#allocation2 + $0x10] sm:$0xff] %v154
    %204 = vst.msk [vmem:[#allocation2 + $0x18] sm:$0xff] %vm201, %v183
    %205 = vst [vmem:[#allocation2 + $0x20] sm:$0xff] %v157
    %206 = vst.msk [vmem:[#allocation2 + $0x28] sm:$0xff] %vm201, %v186
    %207 = vst [vmem:[#allocation2 + $0x30] sm:$0xff] %v159
    %208 = vst.msk [vmem:[#allocation2 + $0x38] sm:$0xff] %vm201, %v188
    %209 = vst [vmem:[#allocation2 + $0x40] sm:$0xff] %v162
    %210 = vst.msk [vmem:[#allocation2 + $0x48] sm:$0xff] %vm201, %v191
    %211 = vst [vmem:[#allocation2 + $0x50] sm:$0xff] %v164
    %212 = vst.msk [vmem:[#allocation2 + $0x58] sm:$0xff] %vm201, %v193
    %213 = vst [vmem:[#allocation2 + $0x60] sm:$0xff] %v167
    %214 = vst.msk [vmem:[#allocation2 + $0x68] sm:$0xff] %vm201, %v196
    %215 = vst [vmem:[#allocation2 + $0x70] sm:$0xff] %v169
    %216 = vst.msk [vmem:[#allocation2 + $0x78] sm:$0xff] %vm201, %v198
    %v217 = vld [vmem:[#allocation5] sm:$0xff]
    %v218 = vld [vmem:[#allocation5 + $0x8] sm:$0xff]
    %v219 = vld [vmem:[#allocation5 + $0x10] sm:$0xff]
    %v220 = vld [vmem:[#allocation5 + $0x18] sm:$0xff]
    %v221 = vld [vmem:[#allocation5 + $0x20] sm:$0xff]
    %v222 = vld [vmem:[#allocation5 + $0x28] sm:$0xff]
    %v223 = vld [vmem:[#allocation5 + $0x30] sm:$0xff]
    %v224 = vld [vmem:[#allocation5 + $0x38] sm:$0xff]
    %v225 = vld [vmem:[%s3] sm:$0x1]
    %s226 = smul.u32 0, 2
    %s227 = smul.addr %s226, 8
    %s228 = scalar_lea.vmem [#allocation2], %s227
    %v229 = vld [vmem:[%s228] sm:$0xff]
    %v230 = vld [vmem:[%s228 + $0x8] sm:$0xff]
    %v239 = vunpack.c.l.b16 %v217
    %v240 = vunpack.c.h.b16 %v217
    %v241 = vunpack.c.l.b16 %v218
    %v242 = vunpack.c.h.b16 %v218
    %v243 = vunpack.c.l.b16 %v219
    %v244 = vunpack.c.h.b16 %v219
    %v245 = vunpack.c.l.b16 %v220
    %v246 = vunpack.c.h.b16 %v220
    %v247 = vunpack.c.l.b16 %v221
    %v248 = vunpack.c.h.b16 %v221
    %v249 = vunpack.c.l.b16 %v222
    %v250 = vunpack.c.h.b16 %v222
    %v251 = vunpack.c.l.b16 %v223
    %v252 = vunpack.c.h.b16 %v223
    %v253 = vunpack.c.l.b16 %v224
    %v254 = vunpack.c.h.b16 %v224
    %v255 = vpack.c.b16 %v241, %v239
    %v256 = vpack.c.b16 %v242, %v240
    %v257 = vpack.c.b16 %v245, %v243
    %v258 = vpack.c.b16 %v246, %v244
    %v259 = vpack.c.b16 %v249, %v247
    %v260 = vpack.c.b16 %v250, %v248
    %v261 = vpack.c.b16 %v253, %v251
    %v262 = vpack.c.b16 %v254, %v252
    %v272 = vsel %vm201, 0, 0
    %274 = vmatpush.bf16.msra.mxu0 0
    %275 = vmatpush.bf16.msra.mxu0 0
    %276 = vmatpush.bf16.msra.mxu0 0
    %277 = vmatpush.bf16.msra.mxu0 0
    %278 = vmatpush.bf16.msra.mxu0 %v261
    %279 = vmatpush.bf16.msra.mxu0 %v259
    %280 = vmatpush.bf16.msra.mxu0 %v257
    %281 = vmatpush.bf16.msra.mxu0 %v255
    %282 = vmatmul.bf16.gmra.mxu0 %v272
    %v283 = vpop.f32.mrf.mxu0
    %v284 = vadd.f32 0.0, %v283
    %v285 = vpop.f32.mrf.mxu0
    %286 = vdwg.mxu0
    %287 = vmatpush.bf16.msra.mxu0 0
    %288 = vmatpush.bf16.msra.mxu0 0
    %289 = vmatpush.bf16.msra.mxu0 0
    %290 = vmatpush.bf16.msra.mxu0 0
    %291 = vmatpush.bf16.msra.mxu0 %v262
    %292 = vmatpush.bf16.msra.mxu0 %v260
    %293 = vmatpush.bf16.msra.mxu0 %v258
    %294 = vmatpush.bf16.msra.mxu0 %v256
    %295 = vmatmul.bf16.gmra.mxu0 %v272
    %v296 = vpop.f32.mrf.mxu0
    %v297 = vadd.f32 0.0, %v296
    %v298 = vpop.f32.mrf.mxu0
    %299 = vdwg.mxu0
    %v300 = vadd.f32 %v229, %v284
    %v301 = vxor.u32 %v300, 2147483648
    %v302 = vmul.f32 %v301, 1.442695
    %v303 = vpow.pop %v302
    %v304 = vadd.f32 %v303, 1.0
    %v305 = vrcp.pop %v304
    %v306 = vmul.f32 %v304, %v305
    %v307 = vsub.f32 1.0, %v306
    %v308 = vmul.f32 %v305, %v307
    %v309 = vadd.f32 %v305, %v308
    %vm310 = vweird.f32 %v304
    %vm311 = vweird.f32 %v305
    %vm312 = vmor %vm310, %vm311
    %v313 = vsel %vm312, %v305, %v309
    %v314 = vand.u32 2147483647, %v304
    %vm315 = vcmp.eq.f32.partialorder %v314, 8.507059e+37
    %v316 = vand.u32 %v304, 2147483648
    %v317 = vor.u32 1.1754944e-38, %v316
    %v318 = vsel %vm315, %v317, %v313
    %v319 = vmul.f32 1.0, %v318
    %v321 = vperm.slane %v225, 0
    %v323 = vadd.f32 %v297, %v321
    %v324 = vmul.f32 %v319, %v323
    %v325 = vadd.f32 %v230, %v324
    %v326 = vtanh.pop %v325
    %v327 = vsub.f32 1.0, %v319
    %329 = vrot.lane.b32.xlu0 %v326, 64
    %v330 = vpop.permute.xlu0 %329
    %v332 = vmul.f32 %v327, %v330
    %v333 = vmul.f32 %v319, 0.0
    %v334 = vadd.f32 %v332, %v333
    %336 = vrot.lane.b32.xlu0 %v334, 64
    %v337 = vpop.permute.xlu0 %336
    %vm339 = vcmask 261120
    %340 = vst.msk [vmem:[#allocation3] sm:$0xff] %vm339, %v337
    %341 = vrot.lane.b32.xlu0 %v334, 32
    %v342 = vpop.permute.xlu0 %341
    %s344 = scalar_lea.vmem [#allocation4], 56
    %345 = vst.msk [vmem:[%s344] sm:$0xff] %vm339, %v342
    %s346 = smul.u32 1, 2
    %s347 = smul.addr %s346, 8
    %s348 = scalar_lea.vmem [#allocation2], %s347
    %v349 = vld [vmem:[%s348] sm:$0xff]
    %v350 = vld [vmem:[%s348 + $0x8] sm:$0xff]
    %v351 = vpack.c.bf16 %v334, %v334
    %353 = vrot.lane.b32.xlu0 %v351, 64
    %v354 = vpop.permute.xlu0 %353
    %v356 = vsel %vm201, %v354, 0
    %358 = vmatpush.bf16.msra.mxu0 0
    %359 = vmatpush.bf16.msra.mxu0 0
    %360 = vmatpush.bf16.msra.mxu0 0
    %361 = vmatpush.bf16.msra.mxu0 0
    %362 = vmatpush.bf16.msra.mxu0 %v261
    %363 = vmatpush.bf16.msra.mxu0 %v259
    %364 = vmatpush.bf16.msra.mxu0 %v257
    %365 = vmatpush.bf16.msra.mxu0 %v255
    %366 = vmatmul.bf16.gmra.mxu0 %v356
    %v367 = vpop.f32.mrf.mxu0
    %v368 = vadd.f32 0.0, %v367
    %v369 = vpop.f32.mrf.mxu0
    %370 = vdwg.mxu0
    %371 = vmatpush.bf16.msra.mxu0 0
    %372 = vmatpush.bf16.msra.mxu0 0
    %373 = vmatpush.bf16.msra.mxu0 0
    %374 = vmatpush.bf16.msra.mxu0 0
    %375 = vmatpush.bf16.msra.mxu0 %v262
    %376 = vmatpush.bf16.msra.mxu0 %v260
    %377 = vmatpush.bf16.msra.mxu0 %v258
    %378 = vmatpush.bf16.msra.mxu0 %v256
    %379 = vmatmul.bf16.gmra.mxu0 %v356
    %v380 = vpop.f32.mrf.mxu0
    %v381 = vadd.f32 0.0, %v380
    %v382 = vpop.f32.mrf.mxu0
    %383 = vdwg.mxu0
    %v384 = vadd.f32 %v349, %v368
    %v385 = vxor.u32 %v384, 2147483648
    %v386 = vmul.f32 %v385, 1.442695
    %v387 = vpow.pop %v386
    %v388 = vadd.f32 %v387, 1.0
    %v389 = vrcp.pop %v388
    %v390 = vmul.f32 %v388, %v389
    %v391 = vsub.f32 1.0, %v390
    %v392 = vmul.f32 %v389, %v391
    %v393 = vadd.f32 %v389, %v392
    %vm394 = vweird.f32 %v388
    %vm395 = vweird.f32 %v389
    %vm396 = vmor %vm394, %vm395
    %v397 = vsel %vm396, %v389, %v393
    %v398 = vand.u32 2147483647, %v388
    %vm399 = vcmp.eq.f32.partialorder %v398, 8.507059e+37
    %v400 = vand.u32 %v388, 2147483648
    %v401 = vor.u32 1.1754944e-38, %v400
    %v402 = vsel %vm399, %v401, %v397
    %v403 = vmul.f32 1.0, %v402
    %v404 = vadd.f32 %v381, %v321
    %v405 = vmul.f32 %v403, %v404
    %v406 = vadd.f32 %v350, %v405
    %v407 = vtanh.pop %v406
    %v408 = vsub.f32 1.0, %v403
    %410 = vrot.lane.b32.xlu0 %v407, 64
    %v411 = vpop.permute.xlu0 %410
    %v413 = vmul.f32 %v408, %v411
    %v414 = vmul.f32 %v403, %v334
    %v415 = vadd.f32 %v413, %v414
    %417 = vrot.lane.b32.xlu0 %v415, 64
    %v418 = vpop.permute.xlu0 %417
    %s420 = scalar_lea.vmem [#allocation3], 8
    %421 = vst.msk [vmem:[%s420] sm:$0xff] %vm339, %v418
    %422 = vrot.lane.b32.xlu0 %v415, 32
    %v423 = vpop.permute.xlu0 %422
    %s425 = scalar_lea.vmem [#allocation4], 48
    %426 = vst.msk [vmem:[%s425] sm:$0xff] %vm339, %v423
    %s427 = smul.u32 2, 2
    %s428 = smul.addr %s427, 8
    %s429 = scalar_lea.vmem [#allocation2], %s428
    %v430 = vld [vmem:[%s429] sm:$0xff]
    %v431 = vld [vmem:[%s429 + $0x8] sm:$0xff]
    %v432 = vpack.c.bf16 %v415, %v415
    %434 = vrot.lane.b32.xlu0 %v432, 64
    %v435 = vpop.permute.xlu0 %434
    %v437 = vsel %vm201, %v435, 0
    %439 = vmatpush.bf16.msra.mxu0 0
    %440 = vmatpush.bf16.msra.mxu0 0
    %441 = vmatpush.bf16.msra.mxu0 0
    %442 = vmatpush.bf16.msra.mxu0 0
    %443 = vmatpush.bf16.msra.mxu0 %v261
    %444 = vmatpush.bf16.msra.mxu0 %v259
    %445 = vmatpush.bf16.msra.mxu0 %v257
    %446 = vmatpush.bf16.msra.mxu0 %v255
    %447 = vmatmul.bf16.gmra.mxu0 %v437
    %v448 = vpop.f32.mrf.mxu0
    %v449 = vadd.f32 0.0, %v448
    %v450 = vpop.f32.mrf.mxu0
    %451 = vdwg.mxu0
    %452 = vmatpush.bf16.msra.mxu0 0
    %453 = vmatpush.bf16.msra.mxu0 0
    %454 = vmatpush.bf16.msra.mxu0 0
    %455 = vmatpush.bf16.msra.mxu0 0
    %456 = vmatpush.bf16.msra.mxu0 %v262
    %457 = vmatpush.bf16.msra.mxu0 %v260
    %458 = vmatpush.bf16.msra.mxu0 %v258
    %459 = vmatpush.bf16.msra.mxu0 %v256
    %460 = vmatmul.bf16.gmra.mxu0 %v437
    %v461 = vpop.f32.mrf.mxu0
    %v462 = vadd.f32 0.0, %v461
    %v463 = vpop.f32.mrf.mxu0
    %464 = vdwg.mxu0
    %v465 = vadd.f32 %v430, %v449
    %v466 = vxor.u32 %v465, 2147483648
    %v467 = vmul.f32 %v466, 1.442695
    %v468 = vpow.pop %v467
    %v469 = vadd.f32 %v468, 1.0
    %v470 = vrcp.pop %v469
    %v471 = vmul.f32 %v469, %v470
    %v472 = vsub.f32 1.0, %v471
    %v473 = vmul.f32 %v470, %v472
    %v474 = vadd.f32 %v470, %v473
    %vm475 = vweird.f32 %v469
    %vm476 = vweird.f32 %v470
    %vm477 = vmor %vm475, %vm476
    %v478 = vsel %vm477, %v470, %v474
    %v479 = vand.u32 2147483647, %v469
    %vm480 = vcmp.eq.f32.partialorder %v479, 8.507059e+37
    %v481 = vand.u32 %v469, 2147483648
    %v482 = vor.u32 1.1754944e-38, %v481
    %v483 = vsel %vm480, %v482, %v478
    %v484 = vmul.f32 1.0, %v483
    %v485 = vadd.f32 %v462, %v321
    %v486 = vmul.f32 %v484, %v485
    %v487 = vadd.f32 %v431, %v486
    %v488 = vtanh.pop %v487
    %v489 = vsub.f32 1.0, %v484
    %491 = vrot.lane.b32.xlu0 %v488, 64
    %v492 = vpop.permute.xlu0 %491
    %v494 = vmul.f32 %v489, %v492
    %v495 = vmul.f32 %v484, %v415
    %v496 = vadd.f32 %v494, %v495
    %498 = vrot.lane.b32.xlu0 %v496, 64
    %v499 = vpop.permute.xlu0 %498
    %s501 = scalar_lea.vmem [#allocation3], 16
    %502 = vst.msk [vmem:[%s501] sm:$0xff] %vm339, %v499
    %503 = vrot.lane.b32.xlu0 %v496, 32
    %v504 = vpop.permute.xlu0 %503
    %s506 = scalar_lea.vmem [#allocation4], 40
    %507 = vst.msk [vmem:[%s506] sm:$0xff] %vm339, %v504
    %s508 = smul.u32 3, 2
    %s509 = smul.addr %s508, 8
    %s510 = scalar_lea.vmem [#allocation2], %s509
    %v511 = vld [vmem:[%s510] sm:$0xff]
    %v512 = vld [vmem:[%s510 + $0x8] sm:$0xff]
    %v513 = vpack.c.bf16 %v496, %v496
    %515 = vrot.lane.b32.xlu0 %v513, 64
    %v516 = vpop.permute.xlu0 %515
    %v518 = vsel %vm201, %v516, 0
    %520 = vmatpush.bf16.msra.mxu0 0
    %521 = vmatpush.bf16.msra.mxu0 0
    %522 = vmatpush.bf16.msra.mxu0 0
    %523 = vmatpush.bf16.msra.mxu0 0
    %524 = vmatpush.bf16.msra.mxu0 %v261
    %525 = vmatpush.bf16.msra.mxu0 %v259
    %526 = vmatpush.bf16.msra.mxu0 %v257
    %527 = vmatpush.bf16.msra.mxu0 %v255
    %528 = vmatmul.bf16.gmra.mxu0 %v518
    %v529 = vpop.f32.mrf.mxu0
    %v530 = vadd.f32 0.0, %v529
    %v531 = vpop.f32.mrf.mxu0
    %532 = vdwg.mxu0
    %533 = vmatpush.bf16.msra.mxu0 0
    %534 = vmatpush.bf16.msra.mxu0 0
    %535 = vmatpush.bf16.msra.mxu0 0
    %536 = vmatpush.bf16.msra.mxu0 0
    %537 = vmatpush.bf16.msra.mxu0 %v262
    %538 = vmatpush.bf16.msra.mxu0 %v260
    %539 = vmatpush.bf16.msra.mxu0 %v258
    %540 = vmatpush.bf16.msra.mxu0 %v256
    %541 = vmatmul.bf16.gmra.mxu0 %v518
    %v542 = vpop.f32.mrf.mxu0
    %v543 = vadd.f32 0.0, %v542
    %v544 = vpop.f32.mrf.mxu0
    %545 = vdwg.mxu0
    %v546 = vadd.f32 %v511, %v530
    %v547 = vxor.u32 %v546, 2147483648
    %v548 = vmul.f32 %v547, 1.442695
    %v549 = vpow.pop %v548
    %v550 = vadd.f32 %v549, 1.0
    %v551 = vrcp.pop %v550
    %v552 = vmul.f32 %v550, %v551
    %v553 = vsub.f32 1.0, %v552
    %v554 = vmul.f32 %v551, %v553
    %v555 = vadd.f32 %v551, %v554
    %vm556 = vweird.f32 %v550
    %vm557 = vweird.f32 %v551
    %vm558 = vmor %vm556, %vm557
    %v559 = vsel %vm558, %v551, %v555
    %v560 = vand.u32 2147483647, %v550
    %vm561 = vcmp.eq.f32.partialorder %v560, 8.507059e+37
    %v562 = vand.u32 %v550, 2147483648
    %v563 = vor.u32 1.1754944e-38, %v562
    %v564 = vsel %vm561, %v563, %v559
    %v565 = vmul.f32 1.0, %v564
    %v566 = vadd.f32 %v543, %v321
    %v567 = vmul.f32 %v565, %v566
    %v568 = vadd.f32 %v512, %v567
    %v569 = vtanh.pop %v568
    %v570 = vsub.f32 1.0, %v565
    %572 = vrot.lane.b32.xlu0 %v569, 64
    %v573 = vpop.permute.xlu0 %572
    %v575 = vmul.f32 %v570, %v573
    %v576 = vmul.f32 %v565, %v496
    %v577 = vadd.f32 %v575, %v576
    %579 = vrot.lane.b32.xlu0 %v577, 64
    %v580 = vpop.permute.xlu0 %579
    %s582 = scalar_lea.vmem [#allocation3], 24
    %583 = vst.msk [vmem:[%s582] sm:$0xff] %vm339, %v580
    %584 = vrot.lane.b32.xlu0 %v577, 32
    %v585 = vpop.permute.xlu0 %584
    %s587 = scalar_lea.vmem [#allocation4], 32
    %588 = vst.msk [vmem:[%s587] sm:$0xff] %vm339, %v585
    %s589 = smul.u32 4, 2
    %s590 = smul.addr %s589, 8
    %s591 = scalar_lea.vmem [#allocation2], %s590
    %v592 = vld [vmem:[%s591] sm:$0xff]
    %v593 = vld [vmem:[%s591 + $0x8] sm:$0xff]
    %v594 = vpack.c.bf16 %v577, %v577
    %596 = vrot.lane.b32.xlu0 %v594, 64
    %v597 = vpop.permute.xlu0 %596
    %v599 = vsel %vm201, %v597, 0
    %601 = vmatpush.bf16.msra.mxu0 0
    %602 = vmatpush.bf16.msra.mxu0 0
    %603 = vmatpush.bf16.msra.mxu0 0
    %604 = vmatpush.bf16.msra.mxu0 0
    %605 = vmatpush.bf16.msra.mxu0 %v261
    %606 = vmatpush.bf16.msra.mxu0 %v259
    %607 = vmatpush.bf16.msra.mxu0 %v257
    %608 = vmatpush.bf16.msra.mxu0 %v255
    %609 = vmatmul.bf16.gmra.mxu0 %v599
    %v610 = vpop.f32.mrf.mxu0
    %v611 = vadd.f32 0.0, %v610
    %v612 = vpop.f32.mrf.mxu0
    %613 = vdwg.mxu0
    %614 = vmatpush.bf16.msra.mxu0 0
    %615 = vmatpush.bf16.msra.mxu0 0
    %616 = vmatpush.bf16.msra.mxu0 0
    %617 = vmatpush.bf16.msra.mxu0 0
    %618 = vmatpush.bf16.msra.mxu0 %v262
    %619 = vmatpush.bf16.msra.mxu0 %v260
    %620 = vmatpush.bf16.msra.mxu0 %v258
    %621 = vmatpush.bf16.msra.mxu0 %v256
    %622 = vmatmul.bf16.gmra.mxu0 %v599
    %v623 = vpop.f32.mrf.mxu0
    %v624 = vadd.f32 0.0, %v623
    %v625 = vpop.f32.mrf.mxu0
    %626 = vdwg.mxu0
    %v627 = vadd.f32 %v592, %v611
    %v628 = vxor.u32 %v627, 2147483648
    %v629 = vmul.f32 %v628, 1.442695
    %v630 = vpow.pop %v629
    %v631 = vadd.f32 %v630, 1.0
    %v632 = vrcp.pop %v631
    %v633 = vmul.f32 %v631, %v632
    %v634 = vsub.f32 1.0, %v633
    %v635 = vmul.f32 %v632, %v634
    %v636 = vadd.f32 %v632, %v635
    %vm637 = vweird.f32 %v631
    %vm638 = vweird.f32 %v632
    %vm639 = vmor %vm637, %vm638
    %v640 = vsel %vm639, %v632, %v636
    %v641 = vand.u32 2147483647, %v631
    %vm642 = vcmp.eq.f32.partialorder %v641, 8.507059e+37
    %v643 = vand.u32 %v631, 2147483648
    %v644 = vor.u32 1.1754944e-38, %v643
    %v645 = vsel %vm642, %v644, %v640
    %v646 = vmul.f32 1.0, %v645
    %v647 = vadd.f32 %v624, %v321
    %v648 = vmul.f32 %v646, %v647
    %v649 = vadd.f32 %v593, %v648
    %v650 = vtanh.pop %v649
    %v651 = vsub.f32 1.0, %v646
    %653 = vrot.lane.b32.xlu0 %v650, 64
    %v654 = vpop.permute.xlu0 %653
    %v656 = vmul.f32 %v651, %v654
    %v657 = vmul.f32 %v646, %v577
    %v658 = vadd.f32 %v656, %v657
    %660 = vrot.lane.b32.xlu0 %v658, 64
    %v661 = vpop.permute.xlu0 %660
    %s663 = scalar_lea.vmem [#allocation3], 32
    %664 = vst.msk [vmem:[%s663] sm:$0xff] %vm339, %v661
    %665 = vrot.lane.b32.xlu0 %v658, 32
    %v666 = vpop.permute.xlu0 %665
    %s668 = scalar_lea.vmem [#allocation4], 24
    %669 = vst.msk [vmem:[%s668] sm:$0xff] %vm339, %v666
    %s670 = smul.u32 5, 2
    %s671 = smul.addr %s670, 8
    %s672 = scalar_lea.vmem [#allocation2], %s671
    %v673 = vld [vmem:[%s672] sm:$0xff]
    %v674 = vld [vmem:[%s672 + $0x8] sm:$0xff]
    %v675 = vpack.c.bf16 %v658, %v658
    %677 = vrot.lane.b32.xlu0 %v675, 64
    %v678 = vpop.permute.xlu0 %677
    %v680 = vsel %vm201, %v678, 0
    %682 = vmatpush.bf16.msra.mxu0 0
    %683 = vmatpush.bf16.msra.mxu0 0
    %684 = vmatpush.bf16.msra.mxu0 0
    %685 = vmatpush.bf16.msra.mxu0 0
    %686 = vmatpush.bf16.msra.mxu0 %v261
    %687 = vmatpush.bf16.msra.mxu0 %v259
    %688 = vmatpush.bf16.msra.mxu0 %v257
    %689 = vmatpush.bf16.msra.mxu0 %v255
    %690 = vmatmul.bf16.gmra.mxu0 %v680
    %v691 = vpop.f32.mrf.mxu0
    %v692 = vadd.f32 0.0, %v691
    %v693 = vpop.f32.mrf.mxu0
    %694 = vdwg.mxu0
    %695 = vmatpush.bf16.msra.mxu0 0
    %696 = vmatpush.bf16.msra.mxu0 0
    %697 = vmatpush.bf16.msra.mxu0 0
    %698 = vmatpush.bf16.msra.mxu0 0
    %699 = vmatpush.bf16.msra.mxu0 %v262
    %700 = vmatpush.bf16.msra.mxu0 %v260
    %701 = vmatpush.bf16.msra.mxu0 %v258
    %702 = vmatpush.bf16.msra.mxu0 %v256
    %703 = vmatmul.bf16.gmra.mxu0 %v680
    %v704 = vpop.f32.mrf.mxu0
    %v705 = vadd.f32 0.0, %v704
    %v706 = vpop.f32.mrf.mxu0
    %707 = vdwg.mxu0
    %v708 = vadd.f32 %v673, %v692
    %v709 = vxor.u32 %v708, 2147483648
    %v710 = vmul.f32 %v709, 1.442695
    %v711 = vpow.pop %v710
    %v712 = vadd.f32 %v711, 1.0
    %v713 = vrcp.pop %v712
    %v714 = vmul.f32 %v712, %v713
    %v715 = vsub.f32 1.0, %v714
    %v716 = vmul.f32 %v713, %v715
    %v717 = vadd.f32 %v713, %v716
    %vm718 = vweird.f32 %v712
    %vm719 = vweird.f32 %v713
    %vm720 = vmor %vm718, %vm719
    %v721 = vsel %vm720, %v713, %v717
    %v722 = vand.u32 2147483647, %v712
    %vm723 = vcmp.eq.f32.partialorder %v722, 8.507059e+37
    %v724 = vand.u32 %v712, 2147483648
    %v725 = vor.u32 1.1754944e-38, %v724
    %v726 = vsel %vm723, %v725, %v721
    %v727 = vmul.f32 1.0, %v726
    %v728 = vadd.f32 %v705, %v321
    %v729 = vmul.f32 %v727, %v728
    %v730 = vadd.f32 %v674, %v729
    %v731 = vtanh.pop %v730
    %v732 = vsub.f32 1.0, %v727
    %734 = vrot.lane.b32.xlu0 %v731, 64
    %v735 = vpop.permute.xlu0 %734
    %v737 = vmul.f32 %v732, %v735
    %v738 = vmul.f32 %v727, %v658
    %v739 = vadd.f32 %v737, %v738
    %741 = vrot.lane.b32.xlu0 %v739, 64
    %v742 = vpop.permute.xlu0 %741
    %s744 = scalar_lea.vmem [#allocation3], 40
    %745 = vst.msk [vmem:[%s744] sm:$0xff] %vm339, %v742
    %746 = vrot.lane.b32.xlu0 %v739, 32
    %v747 = vpop.permute.xlu0 %746
    %s749 = scalar_lea.vmem [#allocation4], 16
    %750 = vst.msk [vmem:[%s749] sm:$0xff] %vm339, %v747
    %s751 = smul.u32 6, 2
    %s752 = smul.addr %s751, 8
    %s753 = scalar_lea.vmem [#allocation2], %s752
    %v754 = vld [vmem:[%s753] sm:$0xff]
    %v755 = vld [vmem:[%s753 + $0x8] sm:$0xff]
    %v756 = vpack.c.bf16 %v739, %v739
    %758 = vrot.lane.b32.xlu0 %v756, 64
    %v759 = vpop.permute.xlu0 %758
    %v761 = vsel %vm201, %v759, 0
    %763 = vmatpush.bf16.msra.mxu0 0
    %764 = vmatpush.bf16.msra.mxu0 0
    %765 = vmatpush.bf16.msra.mxu0 0
    %766 = vmatpush.bf16.msra.mxu0 0
    %767 = vmatpush.bf16.msra.mxu0 %v261
    %768 = vmatpush.bf16.msra.mxu0 %v259
    %769 = vmatpush.bf16.msra.mxu0 %v257
    %770 = vmatpush.bf16.msra.mxu0 %v255
    %771 = vmatmul.bf16.gmra.mxu0 %v761
    %v772 = vpop.f32.mrf.mxu0
    %v773 = vadd.f32 0.0, %v772
    %v774 = vpop.f32.mrf.mxu0
    %775 = vdwg.mxu0
    %776 = vmatpush.bf16.msra.mxu0 0
    %777 = vmatpush.bf16.msra.mxu0 0
    %778 = vmatpush.bf16.msra.mxu0 0
    %779 = vmatpush.bf16.msra.mxu0 0
    %780 = vmatpush.bf16.msra.mxu0 %v262
    %781 = vmatpush.bf16.msra.mxu0 %v260
    %782 = vmatpush.bf16.msra.mxu0 %v258
    %783 = vmatpush.bf16.msra.mxu0 %v256
    %784 = vmatmul.bf16.gmra.mxu0 %v761
    %v785 = vpop.f32.mrf.mxu0
    %v786 = vadd.f32 0.0, %v785
    %v787 = vpop.f32.mrf.mxu0
    %788 = vdwg.mxu0
    %v789 = vadd.f32 %v754, %v773
    %v790 = vxor.u32 %v789, 2147483648
    %v791 = vmul.f32 %v790, 1.442695
    %v792 = vpow.pop %v791
    %v793 = vadd.f32 %v792, 1.0
    %v794 = vrcp.pop %v793
    %v795 = vmul.f32 %v793, %v794
    %v796 = vsub.f32 1.0, %v795
    %v797 = vmul.f32 %v794, %v796
    %v798 = vadd.f32 %v794, %v797
    %vm799 = vweird.f32 %v793
    %vm800 = vweird.f32 %v794
    %vm801 = vmor %vm799, %vm800
    %v802 = vsel %vm801, %v794, %v798
    %v803 = vand.u32 2147483647, %v793
    %vm804 = vcmp.eq.f32.partialorder %v803, 8.507059e+37
    %v805 = vand.u32 %v793, 2147483648
    %v806 = vor.u32 1.1754944e-38, %v805
    %v807 = vsel %vm804, %v806, %v802
    %v808 = vmul.f32 1.0, %v807
    %v809 = vadd.f32 %v786, %v321
    %v810 = vmul.f32 %v808, %v809
    %v811 = vadd.f32 %v755, %v810
    %v812 = vtanh.pop %v811
    %v813 = vsub.f32 1.0, %v808
    %815 = vrot.lane.b32.xlu0 %v812, 64
    %v816 = vpop.permute.xlu0 %815
    %v818 = vmul.f32 %v813, %v816
    %v819 = vmul.f32 %v808, %v739
    %v820 = vadd.f32 %v818, %v819
    %822 = vrot.lane.b32.xlu0 %v820, 64
    %v823 = vpop.permute.xlu0 %822
    %s825 = scalar_lea.vmem [#allocation3], 48
    %826 = vst.msk [vmem:[%s825] sm:$0xff] %vm339, %v823
    %827 = vrot.lane.b32.xlu0 %v820, 32
    %v828 = vpop.permute.xlu0 %827
    %s830 = scalar_lea.vmem [#allocation4], 8
    %831 = vst.msk [vmem:[%s830] sm:$0xff] %vm339, %v828
    %s832 = smul.u32 7, 2
    %s833 = smul.addr %s832, 8
    %s834 = scalar_lea.vmem [#allocation2], %s833
    %v835 = vld [vmem:[%s834] sm:$0xff]
    %v836 = vld [vmem:[%s834 + $0x8] sm:$0xff]
    %v837 = vpack.c.bf16 %v820, %v820
    %839 = vrot.lane.b32.xlu0 %v837, 64
    %v840 = vpop.permute.xlu0 %839
    %v842 = vsel %vm201, %v840, 0
    %844 = vmatpush.bf16.msra.mxu0 0
    %845 = vmatpush.bf16.msra.mxu0 0
    %846 = vmatpush.bf16.msra.mxu0 0
    %847 = vmatpush.bf16.msra.mxu0 0
    %848 = vmatpush.bf16.msra.mxu0 %v261
    %849 = vmatpush.bf16.msra.mxu0 %v259
    %850 = vmatpush.bf16.msra.mxu0 %v257
    %851 = vmatpush.bf16.msra.mxu0 %v255
    %852 = vmatmul.bf16.gmra.mxu0 %v842
    %v853 = vpop.f32.mrf.mxu0
    %v854 = vadd.f32 0.0, %v853
    %v855 = vpop.f32.mrf.mxu0
    %856 = vdwg.mxu0
    %857 = vmatpush.bf16.msra.mxu0 0
    %858 = vmatpush.bf16.msra.mxu0 0
    %859 = vmatpush.bf16.msra.mxu0 0
    %860 = vmatpush.bf16.msra.mxu0 0
    %861 = vmatpush.bf16.msra.mxu0 %v262
    %862 = vmatpush.bf16.msra.mxu0 %v260
    %863 = vmatpush.bf16.msra.mxu0 %v258
    %864 = vmatpush.bf16.msra.mxu0 %v256
    %865 = vmatmul.bf16.gmra.mxu0 %v842
    %v866 = vpop.f32.mrf.mxu0
    %v867 = vadd.f32 0.0, %v866
    %v868 = vpop.f32.mrf.mxu0
    %869 = vdwg.mxu0
    %v870 = vadd.f32 %v835, %v854
    %v871 = vxor.u32 %v870, 2147483648
    %v872 = vmul.f32 %v871, 1.442695
    %v873 = vpow.pop %v872
    %v874 = vadd.f32 %v873, 1.0
    %v875 = vrcp.pop %v874
    %v876 = vmul.f32 %v874, %v875
    %v877 = vsub.f32 1.0, %v876
    %v878 = vmul.f32 %v875, %v877
    %v879 = vadd.f32 %v875, %v878
    %vm880 = vweird.f32 %v874
    %vm881 = vweird.f32 %v875
    %vm882 = vmor %vm880, %vm881
    %v883 = vsel %vm882, %v875, %v879
    %v884 = vand.u32 2147483647, %v874
    %vm885 = vcmp.eq.f32.partialorder %v884, 8.507059e+37
    %v886 = vand.u32 %v874, 2147483648
    %v887 = vor.u32 1.1754944e-38, %v886
    %v888 = vsel %vm885, %v887, %v883
    %v889 = vmul.f32 1.0, %v888
    %v890 = vadd.f32 %v867, %v321
    %v891 = vmul.f32 %v889, %v890
    %v892 = vadd.f32 %v836, %v891
    %v893 = vtanh.pop %v892
    %v894 = vsub.f32 1.0, %v889
    %896 = vrot.lane.b32.xlu0 %v893, 64
    %v897 = vpop.permute.xlu0 %896
    %v899 = vmul.f32 %v894, %v897
    %v900 = vmul.f32 %v889, %v820
    %v901 = vadd.f32 %v899, %v900
    %903 = vrot.lane.b32.xlu0 %v901, 64
    %v904 = vpop.permute.xlu0 %903
    %s906 = scalar_lea.vmem [#allocation3], 56
    %907 = vst.msk [vmem:[%s906] sm:$0xff] %vm339, %v904
    %908 = vrot.lane.b32.xlu0 %v901, 32
    %v909 = vpop.permute.xlu0 %908
    %911 = vst.msk [vmem:[#allocation4] sm:$0xff] %vm339, %v909
    %v912 = vld [vmem:[#allocation3] sm:$0xff]
    %v913 = vld [vmem:[#allocation3 + $0x8] sm:$0xff]
    %v914 = vld [vmem:[#allocation3 + $0x10] sm:$0xff]
    %v915 = vld [vmem:[#allocation3 + $0x18] sm:$0xff]
    %v916 = vld [vmem:[#allocation3 + $0x20] sm:$0xff]
    %v917 = vld [vmem:[#allocation3 + $0x28] sm:$0xff]
    %v918 = vld [vmem:[#allocation3 + $0x30] sm:$0xff]
    %v919 = vld [vmem:[#allocation3 + $0x38] sm:$0xff]
    %v920 = vpack.c.bf16 %v913, %v912
    %v921 = vpack.c.bf16 %v915, %v914
    %v922 = vpack.c.bf16 %v917, %v916
    %v923 = vpack.c.bf16 %v919, %v918
    %v924 = vld [vmem:[%s4] sm:$0xf]
    %v925 = vld [vmem:[%s4 + $0x4] sm:$0xf]
    %v926 = vld [vmem:[%s4 + $0x8] sm:$0xf]
    %v927 = vld [vmem:[%s4 + $0xc] sm:$0xf]
    %v928 = vld [vmem:[#allocation4] sm:$0xff]
    %v929 = vld [vmem:[#allocation4 + $0x8] sm:$0xff]
    %v930 = vld [vmem:[#allocation4 + $0x10] sm:$0xff]
    %v931 = vld [vmem:[#allocation4 + $0x18] sm:$0xff]
    %v932 = vld [vmem:[#allocation4 + $0x20] sm:$0xff]
    %v933 = vld [vmem:[#allocation4 + $0x28] sm:$0xff]
    %v934 = vld [vmem:[#allocation4 + $0x30] sm:$0xff]
    %v935 = vld [vmem:[#allocation4 + $0x38] sm:$0xff]
    %v936 = vpack.c.bf16 %v929, %v928
    %v937 = vpack.c.bf16 %v931, %v930
    %v938 = vpack.c.bf16 %v933, %v932
    %v939 = vpack.c.bf16 %v935, %v934
    %s940 = scalar_lea.vmem %s4, 16
    %v941 = vld [vmem:[%s940] sm:$0xf]
    %v942 = vld [vmem:[%s940 + $0x4] sm:$0xf]
    %v943 = vld [vmem:[%s940 + $0x8] sm:$0xf]
    %v944 = vld [vmem:[%s940 + $0xc] sm:$0xf]
    %v949 = vunpack.c.l.b16 %v941
    %v950 = vunpack.c.l.b16 %v942
    %v951 = vunpack.c.l.b16 %v943
    %v952 = vunpack.c.l.b16 %v944
    %v953 = vpack.c.b16 %v950, %v949
    %v954 = vpack.c.b16 %v952, %v951
    %v958 = vsel %vm339, %v936, 0
    %v961 = vsel %vm339, %v937, 0
    %v964 = vsel %vm339, %v938, 0
    %v967 = vsel %vm339, %v939, 0
    %969 = vmatpush.bf16.msra.mxu0 0
    %970 = vmatpush.bf16.msra.mxu0 0
    %971 = vmatpush.bf16.msra.mxu0 0
    %972 = vmatpush.bf16.msra.mxu0 0
    %973 = vmatpush.bf16.msra.mxu0 0
    %974 = vmatpush.bf16.msra.mxu0 0
    %975 = vmatpush.bf16.msra.mxu0 %v954
    %976 = vmatpush.bf16.msra.mxu0 %v953
    %977 = vmatmul.bf16.gmra.mxu0 %v958
    %v978 = vpop.f32.mrf.mxu0
    %v979 = vadd.f32 0.0, %v978
    %v980 = vpop.f32.mrf.mxu0
    %v981 = vadd.f32 0.0, %v980
    %982 = vmatmul.bf16.gmra.mxu0 %v961
    %v983 = vpop.f32.mrf.mxu0
    %v984 = vadd.f32 0.0, %v983
    %v985 = vpop.f32.mrf.mxu0
    %v986 = vadd.f32 0.0, %v985
    %987 = vmatmul.bf16.gmra.mxu0 %v964
    %v988 = vpop.f32.mrf.mxu0
    %v989 = vadd.f32 0.0, %v988
    %v990 = vpop.f32.mrf.mxu0
    %v991 = vadd.f32 0.0, %v990
    %992 = vmatmul.bf16.gmra.mxu0 %v967
    %v993 = vpop.f32.mrf.mxu0
    %v994 = vadd.f32 0.0, %v993
    %v995 = vpop.f32.mrf.mxu0
    %v996 = vadd.f32 0.0, %v995
    %997 = vdwg.mxu0
    %v1002 = vunpack.c.l.b16 %v924
    %v1003 = vunpack.c.l.b16 %v925
    %v1004 = vunpack.c.l.b16 %v926
    %v1005 = vunpack.c.l.b16 %v927
    %v1006 = vpack.c.b16 %v1003, %v1002
    %v1007 = vpack.c.b16 %v1005, %v1004
    %v1011 = vsel %vm339, %v920, 0
    %v1014 = vsel %vm339, %v921, 0
    %v1017 = vsel %vm339, %v922, 0
    %v1020 = vsel %vm339, %v923, 0
    %1022 = vmatpush.bf16.msra.mxu0 0
    %1023 = vmatpush.bf16.msra.mxu0 0
    %1024 = vmatpush.bf16.msra.mxu0 0
    %1025 = vmatpush.bf16.msra.mxu0 0
    %1026 = vmatpush.bf16.msra.mxu0 0
    %1027 = vmatpush.bf16.msra.mxu0 0
    %1028 = vmatpush.bf16.msra.mxu0 %v1007
    %1029 = vmatpush.bf16.msra.mxu0 %v1006
    %1030 = vmatmul.bf16.gmra.mxu0 %v1011
    %v1031 = vpop.f32.mrf.mxu0
    %v1032 = vadd.f32 %v979, %v1031
    %v1033 = vpop.f32.mrf.mxu0
    %v1034 = vadd.f32 %v981, %v1033
    %1035 = vmatmul.bf16.gmra.mxu0 %v1014
    %v1036 = vpop.f32.mrf.mxu0
    %v1037 = vadd.f32 %v984, %v1036
    %v1038 = vpop.f32.mrf.mxu0
    %v1039 = vadd.f32 %v986, %v1038
    %1040 = vmatmul.bf16.gmra.mxu0 %v1017
    %v1041 = vpop.f32.mrf.mxu0
    %v1042 = vadd.f32 %v989, %v1041
    %v1043 = vpop.f32.mrf.mxu0
    %v1044 = vadd.f32 %v991, %v1043
    %1045 = vmatmul.bf16.gmra.mxu0 %v1020
    %v1046 = vpop.f32.mrf.mxu0
    %v1047 = vadd.f32 %v994, %v1046
    %v1048 = vpop.f32.mrf.mxu0
    %v1049 = vadd.f32 %v996, %v1048
    %1050 = vdwg.mxu0
    %v1051 = vld [vmem:[%s5] sm:$0x1]
    %v1053 = vperm.slane %v1051, 0
    %v1055 = vadd.f32 %v1032, %v1053
    %v1056 = vadd.f32 %v1034, %v1053
    %v1057 = vadd.f32 %v1037, %v1053
    %v1058 = vadd.f32 %v1039, %v1053
    %v1059 = vadd.f32 %v1042, %v1053
    %v1060 = vadd.f32 %v1044, %v1053
    %v1061 = vadd.f32 %v1047, %v1053
    %v1062 = vadd.f32 %v1049, %v1053
    %1063 = vst.msk [vmem:[%s6] sm:$0xff] %vm339, %v1055
    %1064 = vst.msk [vmem:[%s6 + $0x8] sm:$0xff] %vm339, %v1056
    %1065 = vst.msk [vmem:[%s6 + $0x10] sm:$0xff] %vm339, %v1057
    %1066 = vst.msk [vmem:[%s6 + $0x18] sm:$0xff] %vm339, %v1058
    %1067 = vst.msk [vmem:[%s6 + $0x20] sm:$0xff] %vm339, %v1059
    %1068 = vst.msk [vmem:[%s6 + $0x28] sm:$0xff] %vm339, %v1060
    %1069 = vst.msk [vmem:[%s6 + $0x30] sm:$0xff] %vm339, %v1061
    %1070 = vst.msk [vmem:[%s6 + $0x38] sm:$0xff] %vm339, %v1062
    // Predicated region
    $region30: #{rnn_graph_wrapper_forward.1} parent=1 // pred_check
      _
    $region31: #{rnn_graph_wrapper_forward.1} parent=1 // pred_check_branch
      %1072 = sbr.rel (0) target = $region33
    $region32: #{rnn_graph_wrapper_forward.1} parent=1 // pred_region
      _
    $region33: #{rnn_graph_wrapper_forward.1} parent=1 // pred_fallthru
      _
    // Predicated region
    $region34: #{rnn_graph_wrapper_forward.1} parent=1 // pred_check
      _
    $region35: #{rnn_graph_wrapper_forward.1} parent=1 // pred_check_branch
      %1074 = sbr.rel (0) target = $region37
    $region36: #{rnn_graph_wrapper_forward.1} parent=1 // pred_region
      _
    $region37: #{rnn_graph_wrapper_forward.1} parent=1 // pred_fallthru
      _
    %1075 = vsyncpa [#allocation6], 1

</llo_original>
